<compile_context>
chip_gen: v7x
topology: tpu7x:2x2x1
jax: 0.10.0
libtpu: 0.0.40
codegen_flags: <defaults>
</compile_context>

<pallas_src>
import jax
import jax.numpy as jnp
from jax.experimental import pallas as pl
from jax.experimental.pallas import tpu as pltpu

# ---------------- synthetic, deterministic configuration ----------------
BATCH = 2
IN_CH = 4
IMG = 16
FEAT_DIM = 32          # backbone "avg_pooling" feature dimension
HIDDEN = 32            # regressor MLP hidden size
NUM_STAGES = 3         # iterative regressor stages
NUM_BODY_JOINTS = 21
IND_DIM = 9            # flattened 3x3 rotation per joint
NUM_PROJ_JOINTS = 24

JOINTS_TO_EXCLUDE = ("head", "left_wrist", "right_wrist")
JOINT_NAME_TO_INDEX = {"head": 14, "left_wrist": 19, "right_wrist": 20}
BODY_INDICES_TO_KEEP = [i for i in range(NUM_BODY_JOINTS)
                        if i not in JOINT_NAME_TO_INDEX.values()]

# groups: group 0 regresses (body_pose, camera), group 1 regresses excluded joints
GROUPS = (("body_pose", "camera"), JOINTS_TO_EXCLUDE)
NUM_GROUPS = len(GROUPS)

GROUP_PARAM_DIMS = (
    len(BODY_INDICES_TO_KEEP) * IND_DIM + 3,      # 165  (body_pose + camera)
    len(JOINTS_TO_EXCLUDE) * IND_DIM,             # 27   (3 excluded joints)
)


def _round_up(n, m):
    return ((n + m - 1) // m) * m


P_PAD = _round_up(max(GROUP_PARAM_DIMS), 128)     # 256 -> lane-dense output slab


# --------------------------- fused Pallas kernel --------------------------
def _fused_kernel(x_ref, bw_ref, bb_ref, mean_ref, w1f_ref, w1p_ref, b1_ref,
                  w2_ref, b2_ref, w3_ref, b3_ref, feat_ref, par_ref):
    """One grid step == one parameter group.

    x_ref   : (B, C, HW)      shared input images (NCHW, spatial flattened)
    bw_ref  : (F, C)          1x1-conv weight          bb_ref : (F, 1) bias
    mean_ref: (1, 1, P_PAD)   group parameter mean (zero padded)
    w1f_ref : (1, F, H)       first-layer weight, feature half
    w1p_ref : (1, P_PAD, H)   first-layer weight, parameter half (zero padded)
    w2/b2   : (1, H, H)/(1, 1, H)
    w3/b3   : (1, H, P_PAD)/(1, 1, P_PAD)   (zero padded)
    feat_ref: (1, B, F)       per-group copy of features
    par_ref : (1, S, B, P_PAD) per-group, per-stage refined parameters
    """
    B = x_ref.shape[0]
    F = bw_ref.shape[0]
    P = mean_ref.shape[-1]

    # ---- backbone: 1x1 conv -> ReLU -> global average pool (NCHW-native) ----
    w = bw_ref[...]                                            # (F, C)
    bias = bb_ref[...]                                         # (F, 1)
    rows = []
    for bi in range(B):                                        # B=2, static unroll
        yb = jnp.dot(w, x_ref[bi], preferred_element_type=jnp.float32) + bias
        yb = jnp.maximum(yb, 0.0)                              # (F, HW) lane-dense
        rows.append(jnp.mean(yb, axis=1).reshape(1, F))        # global avg pool
    feat = jnp.concatenate(rows, axis=0)                       # (B, F)
    feat_ref[0] = feat

    # ---- iterative HMR-style regressor for this group ----
    mean_p = mean_ref[0]                                       # (1, P)
    w1f = w1f_ref[0]
    w1p = w1p_ref[0]
    b1 = b1_ref[0]
    w2 = w2_ref[0]
    b2 = b2_ref[0]
    w3 = w3_ref[0]
    b3 = b3_ref[0]

    # loop-invariant feature half of the first matmul (hoisted out of stages)
    h_feat = jnp.dot(feat, w1f, preferred_element_type=jnp.float32) + b1   # (B, H)
    params = jnp.broadcast_to(mean_p, (B, P))                  # start from mean
    for s in range(NUM_STAGES):                                # iterative refinement
        h = jnp.maximum(
            h_feat + jnp.dot(params, w1p, preferred_element_type=jnp.float32), 0.0)
        h = jnp.maximum(
            jnp.dot(h, w2, preferred_element_type=jnp.float32) + b2, 0.0)
        params = params + jnp.dot(h, w3, preferred_element_type=jnp.float32) + b3
        par_ref[0, s] = params                                 # lane-dense store


def fused_forward(x, backbone_w, backbone_b, packed):
    """x: (B, C, H*W). Returns (features per group, padded flat params)."""
    B = x.shape[0]
    mean_all, w1f_all, w1p_all, b1_all, w2_all, b2_all, w3_all, b3_all = packed
    G = mean_all.shape[0]
    P = mean_all.shape[2]

    def gspec(shape):                      # per-group block (leading group axis)
        nd = len(shape)
        return pl.BlockSpec((1,) + tuple(shape[1:]),
                            lambda g: (g,) + (0,) * (nd - 1))

    def full(shape):                       # whole array, shared by both groups
        return pl.BlockSpec(tuple(shape), lambda g: (0,) * len(shape))

    feat_all, flat_all = pl.pallas_call(
        _fused_kernel,
        out_shape=(
            jax.ShapeDtypeStruct((G, B, FEAT_DIM), jnp.float32),
            jax.ShapeDtypeStruct((G, NUM_STAGES, B, P), jnp.float32),
        ),
        grid=(G,),
        in_specs=[
            full(x.shape), full(backbone_w.shape), full(backbone_b.shape),
            gspec(mean_all.shape), gspec(w1f_all.shape), gspec(w1p_all.shape),
            gspec(b1_all.shape), gspec(w2_all.shape), gspec(b2_all.shape),
            gspec(w3_all.shape), gspec(b3_all.shape),
        ],
        out_specs=(
            gspec((G, B, FEAT_DIM)),
            gspec((G, NUM_STAGES, B, P)),
        ),
        compiler_params=pltpu.CompilerParams(
            dimension_semantics=("parallel",)),   # v7x: one group per TensorCore
    )(x, backbone_w, backbone_b, mean_all, w1f_all, w1p_all, b1_all,
      w2_all, b2_all, w3_all, b3_all)
    return feat_all, flat_all


# --------------------------- parameter setup -----------------------------
def build_param_indices():
    param_indices = []
    n_body = len(BODY_INDICES_TO_KEEP) * IND_DIM
    param_indices.append({"body_pose": (0, n_body), "camera": (n_body, n_body + 3)})
    g1, start = {}, 0
    for jname in JOINTS_TO_EXCLUDE:
        g1[f"{jname}_pose"] = (start, start + IND_DIM)
        start += IND_DIM
    param_indices.append(g1)
    return param_indices


def pack_group_weights(group_means, regressors):
    """Zero-pad each group's params to P_PAD and stack along a group axis."""
    means, w1f, w1p, b1, w2, b2, w3, b3 = [], [], [], [], [], [], [], []
    for mean, (ww1, bb1, ww2, bb2, ww3, bb3) in zip(group_means, regressors):
        P = mean.shape[1]
        pad = P_PAD - P
        means.append(jnp.pad(mean, ((0, 0), (0, pad))))
        w1f.append(ww1[:FEAT_DIM])                              # feature half
        w1p.append(jnp.pad(ww1[FEAT_DIM:], ((0, pad), (0, 0))))  # param half
        b1.append(bb1)
        w2.append(ww2)
        b2.append(bb2)
        w3.append(jnp.pad(ww3, ((0, 0), (0, pad))))
        b3.append(jnp.pad(bb3, ((0, 0), (0, pad))))
    stack = lambda xs: jnp.stack(xs, axis=0)
    return tuple(stack(xs) for xs in (means, w1f, w1p, b1, w2, b2, w3, b3))


def init_params(key):
    ks = jax.random.split(key, 8)
    p = {}
    # TODO(synk): full ResNet backbone not translated; reduced to 1x1 conv + ReLU + GAP.
    p["backbone_w"] = jax.random.normal(ks[0], (FEAT_DIM, IN_CH), jnp.float32) * 0.05
    p["backbone_b"] = jnp.zeros((FEAT_DIM, 1), jnp.float32)

    eye_flat = jnp.eye(3, dtype=jnp.float32).reshape(-1)        # per-joint mean rotation
    body_mean = jnp.tile(eye_flat, (len(BODY_INDICES_TO_KEEP),))
    camera_mean = jnp.array([0.9, 0.0, 0.0], jnp.float32)
    group_means = [
        jnp.concatenate([body_mean, camera_mean]).reshape(1, -1),
        jnp.tile(eye_flat, (len(JOINTS_TO_EXCLUDE),)).reshape(1, -1),
    ]

    regressors, kidx = [], 1
    for mean in group_means:
        P = mean.shape[1]
        w1 = jax.random.normal(ks[kidx], (FEAT_DIM + P, HIDDEN), jnp.float32) * 0.05
        w2 = jax.random.normal(ks[kidx + 1], (HIDDEN, HIDDEN), jnp.float32) * 0.05
        w3 = jax.random.normal(ks[kidx + 2], (HIDDEN, P), jnp.float32) * 0.01
        kidx += 3
        regressors.append((w1, jnp.zeros((1, HIDDEN), jnp.float32),
                           w2, jnp.zeros((1, HIDDEN), jnp.float32),
                           w3, jnp.zeros((1, P), jnp.float32)))
    p["packed"] = pack_group_weights(group_means, regressors)
    return p


# ------------------------------ forward ----------------------------------
def group_regressor_forward(images, params, joints3d_template):
    B, C, H, W = images.shape
    x = images.reshape(B, C, H * W)                             # NCHW-native, no transpose

    feat_all, flat_all = fused_forward(
        x, params["backbone_w"], params["backbone_b"], params["packed"])
    features = feat_all[0]                                      # identical per group

    param_indices = build_param_indices()
    param_dicts = [dict() for _ in range(NUM_STAGES)]
    for gi in range(NUM_GROUPS):                                # flat_params_to_dict
        for s in range(NUM_STAGES):
            for name, (lo, hi) in param_indices[gi].items():
                param_dicts[s][name] = flat_all[gi, s, :, lo:hi]

    # merge per-group poses into the full (B, NUM_BODY_JOINTS, 3, 3) rotation stack
    merged = []
    eye = jnp.broadcast_to(jnp.eye(3, dtype=jnp.float32),
                           (B, NUM_BODY_JOINTS, 3, 3))
    keep_idx = jnp.array(BODY_INDICES_TO_KEEP, dtype=jnp.int32)
    for s in range(NUM_STAGES):
        d = dict(param_dicts[s])
        body = eye.at[:, keep_idx].set(
            d["body_pose"].reshape(B, len(BODY_INDICES_TO_KEEP), 3, 3))
        for jname, jidx in JOINT_NAME_TO_INDEX.items():
            body = body.at[:, jidx].set(d[f"{jname}_pose"].reshape(B, 3, 3))
        d["body_pose"] = body
        merged.append(d)

    # TODO(synk): SMPL-X body model (shape blendshapes + LBS skinning) has no clean
    # Pallas equivalent here; est_joints3d is a deterministic synthetic template.
    est_joints3d = joints3d_template

    # weak-perspective projection (tiny; plain JAX, fused by XLA).
    # stable softplus, computed exactly once (single source of truth).
    camera_params = merged[-1]["camera"]                        # (B, 3)
    scale = jax.nn.softplus(camera_params[:, 0:1])              # camera_scale_func
    translation = camera_params[:, 1:3]
    proj_joints = (scale[:, :, None] * est_joints3d[:, :, :2]
                   + translation[:, None, :])                   # (B, J, 2)

    out = {f"stage_{n:02d}": merged[n] for n in range(NUM_STAGES)}
    out["features"] = features
    out["proj_joints"] = proj_joints
    out["camera_parameters"] = {"scale": scale, "translation": translation}
    out["num_stages"] = NUM_STAGES
    out["stage_keys"] = [f"stage_{n:02d}" for n in range(NUM_STAGES)]
    out[out["stage_keys"][-1]]["proj_joints"] = proj_joints
    return out


if __name__ == "__main__":
    key = jax.random.PRNGKey(0)
    k_img, k_par, k_j = jax.random.split(key, 3)
    images = jax.random.normal(k_img, (BATCH, IN_CH, IMG, IMG), jnp.float32)
    params = init_params(k_par)
    joints3d = jax.random.normal(k_j, (BATCH, NUM_PROJ_JOINTS, 3), jnp.float32) * 0.5

    out = group_regressor_forward(images, params, joints3d)

    jax.block_until_ready(out["features"])
    jax.block_until_ready(out["proj_joints"])
    jax.block_until_ready(out[f"stage_{NUM_STAGES - 1:02d}"]["body_pose"])
    jax.block_until_ready(out[f"stage_{NUM_STAGES - 1:02d}"]["camera"])
    print("KERNEL_OK")
</pallas_src>

<mosaic_0001>
module attributes {stable_mosaic.version = 11 : i64} {
  func.func @_fused_kernel(%arg0: i32, %arg1: memref<2x4x256xf32, #tpu.memory_space<vmem>>, %arg2: memref<32x4xf32, #tpu.memory_space<vmem>>, %arg3: memref<32x1xf32, #tpu.memory_space<vmem>>, %arg4: memref<1x1x256xf32, #tpu.memory_space<vmem>>, %arg5: memref<1x32x32xf32, #tpu.memory_space<vmem>>, %arg6: memref<1x256x32xf32, #tpu.memory_space<vmem>>, %arg7: memref<1x1x32xf32, #tpu.memory_space<vmem>>, %arg8: memref<1x32x32xf32, #tpu.memory_space<vmem>>, %arg9: memref<1x1x32xf32, #tpu.memory_space<vmem>>, %arg10: memref<1x32x256xf32, #tpu.memory_space<vmem>>, %arg11: memref<1x1x256xf32, #tpu.memory_space<vmem>>, %arg12: memref<1x2x32xf32, #tpu.memory_space<vmem>>, %arg13: memref<1x3x2x256xf32, #tpu.memory_space<vmem>>) attributes {dimension_semantics = [#tpu.dimension_semantics<parallel>], iteration_bounds = array<i64: 2>, scalar_prefetch = 0 : i64, scratch_operands = 0 : i64, tpu.core_type = #tpu.core_type<tc>, window_params = [{pipeline_mode = #tpu.pipeline_mode<synchronous>, transform_indices = @transform_0, window_bounds = array<i64: 2, 4, 256>}, {pipeline_mode = #tpu.pipeline_mode<synchronous>, transform_indices = @transform_1, window_bounds = array<i64: 32, 4>}, {pipeline_mode = #tpu.pipeline_mode<synchronous>, transform_indices = @transform_2, window_bounds = array<i64: 32, 1>}, {transform_indices = @transform_3, window_bounds = array<i64: 1, 1, 256>}, {transform_indices = @transform_4, window_bounds = array<i64: 1, 32, 32>}, {transform_indices = @transform_5, window_bounds = array<i64: 1, 256, 32>}, {transform_indices = @transform_6, window_bounds = array<i64: 1, 1, 32>}, {transform_indices = @transform_7, window_bounds = array<i64: 1, 32, 32>}, {transform_indices = @transform_8, window_bounds = array<i64: 1, 1, 32>}, {transform_indices = @transform_9, window_bounds = array<i64: 1, 32, 256>}, {transform_indices = @transform_10, window_bounds = array<i64: 1, 1, 256>}, {transform_indices = @transform_11, window_bounds = array<i64: 1, 2, 32>}, {transform_indices = @transform_12, window_bounds = array<i64: 1, 3, 2, 256>}]} {
    %c0 = arith.constant 0 : index
    %c0_0 = arith.constant 0 : index
    %0 = vector.load %arg2[%c0, %c0_0] : memref<32x4xf32, #tpu.memory_space<vmem>>, vector<32x4xf32>
    %c0_1 = arith.constant 0 : index
    %c0_2 = arith.constant 0 : index
    %1 = vector.load %arg3[%c0_1, %c0_2] : memref<32x1xf32, #tpu.memory_space<vmem>>, vector<32x1xf32>
    %c0_3 = arith.constant 0 : index
    %c0_4 = arith.constant 0 : index
    %c0_5 = arith.constant 0 : index
    %2 = vector.load %arg1[%c0_3, %c0_4, %c0_5] : memref<2x4x256xf32, #tpu.memory_space<vmem>>, vector<1x4x256xf32>
    %3 = vector.shape_cast %2 : vector<1x4x256xf32> to vector<4x256xf32>
    %cst = arith.constant dense<0.000000e+00> : vector<32x256xf32>
    %4 = tpu.matmul %0, %3, %cst {dimension_numbers = #tpu.dot_dimension_numbers<[1], [0], [0], [1], [0, 0, 1, 1], [], []>} : vector<32x4xf32>, vector<4x256xf32>, vector<32x256xf32> -> vector<32x256xf32>
    %5 = vector.broadcast %1 : vector<32x1xf32> to vector<32x256xf32>
    %6 = arith.addf %4, %5 : vector<32x256xf32>
    %cst_6 = arith.constant 0.000000e+00 : f32
    %7 = vector.broadcast %cst_6 : f32 to vector<32x256xf32>
    %8 = arith.maximumf %6, %7 : vector<32x256xf32>
    %cst_7 = arith.constant dense<0.000000e+00> : vector<32xf32>
    %9 = vector.multi_reduction <add>, %8, %cst_7 [1] : vector<32x256xf32> to vector<32xf32>
    %cst_8 = arith.constant 2.560000e+02 : f32
    %10 = vector.broadcast %cst_8 : f32 to vector<32xf32>
    %11 = arith.divf %9, %10 : vector<32xf32>
    %12 = vector.shape_cast %11 : vector<32xf32> to vector<1x32xf32>
    %c1 = arith.constant 1 : index
    %c0_9 = arith.constant 0 : index
    %c0_10 = arith.constant 0 : index
    %13 = vector.load %arg1[%c1, %c0_9, %c0_10] : memref<2x4x256xf32, #tpu.memory_space<vmem>>, vector<1x4x256xf32>
    %14 = vector.shape_cast %13 : vector<1x4x256xf32> to vector<4x256xf32>
    %cst_11 = arith.constant dense<0.000000e+00> : vector<32x256xf32>
    %15 = tpu.matmul %0, %14, %cst_11 {dimension_numbers = #tpu.dot_dimension_numbers<[1], [0], [0], [1], [0, 0, 1, 1], [], []>} : vector<32x4xf32>, vector<4x256xf32>, vector<32x256xf32> -> vector<32x256xf32>
    %16 = vector.broadcast %1 : vector<32x1xf32> to vector<32x256xf32>
    %17 = arith.addf %15, %16 : vector<32x256xf32>
    %cst_12 = arith.constant 0.000000e+00 : f32
    %18 = vector.broadcast %cst_12 : f32 to vector<32x256xf32>
    %19 = arith.maximumf %17, %18 : vector<32x256xf32>
    %cst_13 = arith.constant dense<0.000000e+00> : vector<32xf32>
    %20 = vector.multi_reduction <add>, %19, %cst_13 [1] : vector<32x256xf32> to vector<32xf32>
    %cst_14 = arith.constant 2.560000e+02 : f32
    %21 = vector.broadcast %cst_14 : f32 to vector<32xf32>
    %22 = arith.divf %20, %21 : vector<32xf32>
    %23 = vector.shape_cast %22 : vector<32xf32> to vector<1x32xf32>
    %24 = tpu.concatenate %12, %23 in 0 : vector<1x32xf32>, vector<1x32xf32> -> vector<2x32xf32>
    %c0_15 = arith.constant 0 : index
    %c0_16 = arith.constant 0 : index
    %c0_17 = arith.constant 0 : index
    %25 = vector.load %arg12[%c0_15, %c0_16, %c0_17] : memref<1x2x32xf32, #tpu.memory_space<vmem>>, vector<1x2x32xf32>
    %26 = vector.shape_cast %25 : vector<1x2x32xf32> to vector<2x32xf32>
    %27 = vector.shape_cast %24 : vector<2x32xf32> to vector<1x2x32xf32>
    tpu.vector_store %arg12[%c0_15, %c0_16, %c0_17], %27 {strides = array<i32>} : memref<1x2x32xf32, #tpu.memory_space<vmem>>, vector<1x2x32xf32>,
    %c0_18 = arith.constant 0 : index
    %c0_19 = arith.constant 0 : index
    %c0_20 = arith.constant 0 : index
    %28 = vector.load %arg4[%c0_18, %c0_19, %c0_20] : memref<1x1x256xf32, #tpu.memory_space<vmem>>, vector<1x1x256xf32>
    %29 = vector.shape_cast %28 : vector<1x1x256xf32> to vector<1x256xf32>
    %c0_21 = arith.constant 0 : index
    %c0_22 = arith.constant 0 : index
    %c0_23 = arith.constant 0 : index
    %30 = vector.load %arg5[%c0_21, %c0_22, %c0_23] : memref<1x32x32xf32, #tpu.memory_space<vmem>>, vector<1x32x32xf32>
    %31 = vector.shape_cast %30 : vector<1x32x32xf32> to vector<32x32xf32>
    %c0_24 = arith.constant 0 : index
    %c0_25 = arith.constant 0 : index
    %c0_26 = arith.constant 0 : index
    %32 = vector.load %arg6[%c0_24, %c0_25, %c0_26] : memref<1x256x32xf32, #tpu.memory_space<vmem>>, vector<1x256x32xf32>
    %33 = vector.shape_cast %32 : vector<1x256x32xf32> to vector<256x32xf32>
    %c0_27 = arith.constant 0 : index
    %c0_28 = arith.constant 0 : index
    %c0_29 = arith.constant 0 : index
    %34 = vector.load %arg7[%c0_27, %c0_28, %c0_29] : memref<1x1x32xf32, #tpu.memory_space<vmem>>, vector<1x1x32xf32>
    %35 = vector.shape_cast %34 : vector<1x1x32xf32> to vector<1x32xf32>
    %c0_30 = arith.constant 0 : index
    %c0_31 = arith.constant 0 : index
    %c0_32 = arith.constant 0 : index
    %36 = vector.load %arg8[%c0_30, %c0_31, %c0_32] : memref<1x32x32xf32, #tpu.memory_space<vmem>>, vector<1x32x32xf32>
    %37 = vector.shape_cast %36 : vector<1x32x32xf32> to vector<32x32xf32>
    %c0_33 = arith.constant 0 : index
    %c0_34 = arith.constant 0 : index
    %c0_35 = arith.constant 0 : index
    %38 = vector.load %arg9[%c0_33, %c0_34, %c0_35] : memref<1x1x32xf32, #tpu.memory_space<vmem>>, vector<1x1x32xf32>
    %39 = vector.shape_cast %38 : vector<1x1x32xf32> to vector<1x32xf32>
    %c0_36 = arith.constant 0 : index
    %c0_37 = arith.constant 0 : index
    %c0_38 = arith.constant 0 : index
    %40 = vector.load %arg10[%c0_36, %c0_37, %c0_38] : memref<1x32x256xf32, #tpu.memory_space<vmem>>, vector<1x32x256xf32>
    %41 = vector.shape_cast %40 : vector<1x32x256xf32> to vector<32x256xf32>
    %c0_39 = arith.constant 0 : index
    %c0_40 = arith.constant 0 : index
    %c0_41 = arith.constant 0 : index
    %42 = vector.load %arg11[%c0_39, %c0_40, %c0_41] : memref<1x1x256xf32, #tpu.memory_space<vmem>>, vector<1x1x256xf32>
    %43 = vector.shape_cast %42 : vector<1x1x256xf32> to vector<1x256xf32>
    %cst_42 = arith.constant dense<0.000000e+00> : vector<2x32xf32>
    %44 = tpu.matmul %24, %31, %cst_42 {dimension_numbers = #tpu.dot_dimension_numbers<[1], [0], [0], [1], [0, 0, 1, 1], [], []>} : vector<2x32xf32>, vector<32x32xf32>, vector<2x32xf32> -> vector<2x32xf32>
    %45 = vector.broadcast %35 : vector<1x32xf32> to vector<2x32xf32>
    %46 = arith.addf %44, %45 : vector<2x32xf32>
    %47 = vector.shape_cast %29 : vector<1x256xf32> to vector<1x256xf32>
    %48 = vector.broadcast %47 : vector<1x256xf32> to vector<2x256xf32>
    %cst_43 = arith.constant dense<0.000000e+00> : vector<2x32xf32>
    %49 = tpu.matmul %48, %33, %cst_43 {dimension_numbers = #tpu.dot_dimension_numbers<[1], [0], [0], [1], [0, 0, 1, 1], [], []>} : vector<2x256xf32>, vector<256x32xf32>, vector<2x32xf32> -> vector<2x32xf32>
    %50 = arith.addf %46, %49 : vector<2x32xf32>
    %cst_44 = arith.constant 0.000000e+00 : f32
    %51 = vector.broadcast %cst_44 : f32 to vector<2x32xf32>
    %52 = arith.maximumf %50, %51 : vector<2x32xf32>
    %cst_45 = arith.constant dense<0.000000e+00> : vector<2x32xf32>
    %53 = tpu.matmul %52, %37, %cst_45 {dimension_numbers = #tpu.dot_dimension_numbers<[1], [0], [0], [1], [0, 0, 1, 1], [], []>} : vector<2x32xf32>, vector<32x32xf32>, vector<2x32xf32> -> vector<2x32xf32>
    %54 = vector.broadcast %39 : vector<1x32xf32> to vector<2x32xf32>
    %55 = arith.addf %53, %54 : vector<2x32xf32>
    %cst_46 = arith.constant 0.000000e+00 : f32
    %56 = vector.broadcast %cst_46 : f32 to vector<2x32xf32>
    %57 = arith.maximumf %55, %56 : vector<2x32xf32>
    %cst_47 = arith.constant dense<0.000000e+00> : vector<2x256xf32>
    %58 = tpu.matmul %57, %41, %cst_47 {dimension_numbers = #tpu.dot_dimension_numbers<[1], [0], [0], [1], [0, 0, 1, 1], [], []>} : vector<2x32xf32>, vector<32x256xf32>, vector<2x256xf32> -> vector<2x256xf32>
    %59 = arith.addf %48, %58 : vector<2x256xf32>
    %60 = vector.broadcast %43 : vector<1x256xf32> to vector<2x256xf32>
    %61 = arith.addf %59, %60 : vector<2x256xf32>
    %c0_48 = arith.constant 0 : index
    %c0_49 = arith.constant 0 : index
    %c0_50 = arith.constant 0 : index
    %c0_51 = arith.constant 0 : index
    %62 = vector.load %arg13[%c0_48, %c0_49, %c0_50, %c0_51] : memref<1x3x2x256xf32, #tpu.memory_space<vmem>>, vector<1x1x2x256xf32>
    %63 = vector.shape_cast %62 : vector<1x1x2x256xf32> to vector<2x256xf32>
    %64 = vector.shape_cast %61 : vector<2x256xf32> to vector<1x1x2x256xf32>
    tpu.vector_store %arg13[%c0_48, %c0_49, %c0_50, %c0_51], %64 {strides = array<i32>} : memref<1x3x2x256xf32, #tpu.memory_space<vmem>>, vector<1x1x2x256xf32>,
    %cst_52 = arith.constant dense<0.000000e+00> : vector<2x32xf32>
    %65 = tpu.matmul %61, %33, %cst_52 {dimension_numbers = #tpu.dot_dimension_numbers<[1], [0], [0], [1], [0, 0, 1, 1], [], []>} : vector<2x256xf32>, vector<256x32xf32>, vector<2x32xf32> -> vector<2x32xf32>
    %66 = arith.addf %46, %65 : vector<2x32xf32>
    %cst_53 = arith.constant 0.000000e+00 : f32
    %67 = vector.broadcast %cst_53 : f32 to vector<2x32xf32>
    %68 = arith.maximumf %66, %67 : vector<2x32xf32>
    %cst_54 = arith.constant dense<0.000000e+00> : vector<2x32xf32>
    %69 = tpu.matmul %68, %37, %cst_54 {dimension_numbers = #tpu.dot_dimension_numbers<[1], [0], [0], [1], [0, 0, 1, 1], [], []>} : vector<2x32xf32>, vector<32x32xf32>, vector<2x32xf32> -> vector<2x32xf32>
    %70 = vector.broadcast %39 : vector<1x32xf32> to vector<2x32xf32>
    %71 = arith.addf %69, %70 : vector<2x32xf32>
    %cst_55 = arith.constant 0.000000e+00 : f32
    %72 = vector.broadcast %cst_55 : f32 to vector<2x32xf32>
    %73 = arith.maximumf %71, %72 : vector<2x32xf32>
    %cst_56 = arith.constant dense<0.000000e+00> : vector<2x256xf32>
    %74 = tpu.matmul %73, %41, %cst_56 {dimension_numbers = #tpu.dot_dimension_numbers<[1], [0], [0], [1], [0, 0, 1, 1], [], []>} : vector<2x32xf32>, vector<32x256xf32>, vector<2x256xf32> -> vector<2x256xf32>
    %75 = arith.addf %61, %74 : vector<2x256xf32>
    %76 = vector.broadcast %43 : vector<1x256xf32> to vector<2x256xf32>
    %77 = arith.addf %75, %76 : vector<2x256xf32>
    %c0_57 = arith.constant 0 : index
    %c1_58 = arith.constant 1 : index
    %c0_59 = arith.constant 0 : index
    %c0_60 = arith.constant 0 : index
    %78 = vector.load %arg13[%c0_57, %c1_58, %c0_59, %c0_60] : memref<1x3x2x256xf32, #tpu.memory_space<vmem>>, vector<1x1x2x256xf32>
    %79 = vector.shape_cast %78 : vector<1x1x2x256xf32> to vector<2x256xf32>
    %80 = vector.shape_cast %77 : vector<2x256xf32> to vector<1x1x2x256xf32>
    tpu.vector_store %arg13[%c0_57, %c1_58, %c0_59, %c0_60], %80 {strides = array<i32>} : memref<1x3x2x256xf32, #tpu.memory_space<vmem>>, vector<1x1x2x256xf32>,
    %cst_61 = arith.constant dense<0.000000e+00> : vector<2x32xf32>
    %81 = tpu.matmul %77, %33, %cst_61 {dimension_numbers = #tpu.dot_dimension_numbers<[1], [0], [0], [1], [0, 0, 1, 1], [], []>} : vector<2x256xf32>, vector<256x32xf32>, vector<2x32xf32> -> vector<2x32xf32>
    %82 = arith.addf %46, %81 : vector<2x32xf32>
    %cst_62 = arith.constant 0.000000e+00 : f32
    %83 = vector.broadcast %cst_62 : f32 to vector<2x32xf32>
    %84 = arith.maximumf %82, %83 : vector<2x32xf32>
    %cst_63 = arith.constant dense<0.000000e+00> : vector<2x32xf32>
    %85 = tpu.matmul %84, %37, %cst_63 {dimension_numbers = #tpu.dot_dimension_numbers<[1], [0], [0], [1], [0, 0, 1, 1], [], []>} : vector<2x32xf32>, vector<32x32xf32>, vector<2x32xf32> -> vector<2x32xf32>
    %86 = vector.broadcast %39 : vector<1x32xf32> to vector<2x32xf32>
    %87 = arith.addf %85, %86 : vector<2x32xf32>
    %cst_64 = arith.constant 0.000000e+00 : f32
    %88 = vector.broadcast %cst_64 : f32 to vector<2x32xf32>
    %89 = arith.maximumf %87, %88 : vector<2x32xf32>
    %cst_65 = arith.constant dense<0.000000e+00> : vector<2x256xf32>
    %90 = tpu.matmul %89, %41, %cst_65 {dimension_numbers = #tpu.dot_dimension_numbers<[1], [0], [0], [1], [0, 0, 1, 1], [], []>} : vector<2x32xf32>, vector<32x256xf32>, vector<2x256xf32> -> vector<2x256xf32>
    %91 = arith.addf %77, %90 : vector<2x256xf32>
    %92 = vector.broadcast %43 : vector<1x256xf32> to vector<2x256xf32>
    %93 = arith.addf %91, %92 : vector<2x256xf32>
    %c0_66 = arith.constant 0 : index
    %c2 = arith.constant 2 : index
    %c0_67 = arith.constant 0 : index
    %c0_68 = arith.constant 0 : index
    %94 = vector.load %arg13[%c0_66, %c2, %c0_67, %c0_68] : memref<1x3x2x256xf32, #tpu.memory_space<vmem>>, vector<1x1x2x256xf32>
    %95 = vector.shape_cast %94 : vector<1x1x2x256xf32> to vector<2x256xf32>
    %96 = vector.shape_cast %93 : vector<2x256xf32> to vector<1x1x2x256xf32>
    tpu.vector_store %arg13[%c0_66, %c2, %c0_67, %c0_68], %96 {strides = array<i32>} : memref<1x3x2x256xf32, #tpu.memory_space<vmem>>, vector<1x1x2x256xf32>,
    return
  }
  func.func @transform_0(%arg0: i32) -> (i32, i32, i32) {
    %c0_i32 = arith.constant 0 : i32
    %c0_i32_0 = arith.constant 0 : i32
    %c0_i32_1 = arith.constant 0 : i32
    %c0_i32_2 = arith.constant 0 : i32
    return %c0_i32, %c0_i32_0, %c0_i32_1 : i32, i32, i32
  }
  func.func @transform_1(%arg0: i32) -> (i32, i32) {
    %c0_i32 = arith.constant 0 : i32
    %c0_i32_0 = arith.constant 0 : i32
    %c0_i32_1 = arith.constant 0 : i32
    return %c0_i32, %c0_i32_0 : i32, i32
  }
  func.func @transform_2(%arg0: i32) -> (i32, i32) {
    %c0_i32 = arith.constant 0 : i32
    %c0_i32_0 = arith.constant 0 : i32
    %c0_i32_1 = arith.constant 0 : i32
    return %c0_i32, %c0_i32_0 : i32, i32
  }
  func.func @transform_3(%arg0: i32) -> (i32, i32, i32) {
    %c0_i32 = arith.constant 0 : i32
    %c0_i32_0 = arith.constant 0 : i32
    %c0_i32_1 = arith.constant 0 : i32
    return %arg0, %c0_i32, %c0_i32_0 : i32, i32, i32
  }
  func.func @transform_4(%arg0: i32) -> (i32, i32, i32) {
    %c0_i32 = arith.constant 0 : i32
    %c0_i32_0 = arith.constant 0 : i32
    %c0_i32_1 = arith.constant 0 : i32
    return %arg0, %c0_i32, %c0_i32_0 : i32, i32, i32
  }
  func.func @transform_5(%arg0: i32) -> (i32, i32, i32) {
    %c0_i32 = arith.constant 0 : i32
    %c0_i32_0 = arith.constant 0 : i32
    %c0_i32_1 = arith.constant 0 : i32
    return %arg0, %c0_i32, %c0_i32_0 : i32, i32, i32
  }
  func.func @transform_6(%arg0: i32) -> (i32, i32, i32) {
    %c0_i32 = arith.constant 0 : i32
    %c0_i32_0 = arith.constant 0 : i32
    %c0_i32_1 = arith.constant 0 : i32
    return %arg0, %c0_i32, %c0_i32_0 : i32, i32, i32
  }
  func.func @transform_7(%arg0: i32) -> (i32, i32, i32) {
    %c0_i32 = arith.constant 0 : i32
    %c0_i32_0 = arith.constant 0 : i32
    %c0_i32_1 = arith.constant 0 : i32
    return %arg0, %c0_i32, %c0_i32_0 : i32, i32, i32
  }
  func.func @transform_8(%arg0: i32) -> (i32, i32, i32) {
    %c0_i32 = arith.constant 0 : i32
    %c0_i32_0 = arith.constant 0 : i32
    %c0_i32_1 = arith.constant 0 : i32
    return %arg0, %c0_i32, %c0_i32_0 : i32, i32, i32
  }
  func.func @transform_9(%arg0: i32) -> (i32, i32, i32) {
    %c0_i32 = arith.constant 0 : i32
    %c0_i32_0 = arith.constant 0 : i32
    %c0_i32_1 = arith.constant 0 : i32
    return %arg0, %c0_i32, %c0_i32_0 : i32, i32, i32
  }
  func.func @transform_10(%arg0: i32) -> (i32, i32, i32) {
    %c0_i32 = arith.constant 0 : i32
    %c0_i32_0 = arith.constant 0 : i32
    %c0_i32_1 = arith.constant 0 : i32
    return %arg0, %c0_i32, %c0_i32_0 : i32, i32, i32
  }
  func.func @transform_11(%arg0: i32) -> (i32, i32, i32) {
    %c0_i32 = arith.constant 0 : i32
    %c0_i32_0 = arith.constant 0 : i32
    %c0_i32_1 = arith.constant 0 : i32
    return %arg0, %c0_i32, %c0_i32_0 : i32, i32, i32
  }
  func.func @transform_12(%arg0: i32) -> (i32, i32, i32, i32) {
    %c0_i32 = arith.constant 0 : i32
    %c0_i32_0 = arith.constant 0 : i32
    %c0_i32_1 = arith.constant 0 : i32
    %c0_i32_2 = arith.constant 0 : i32
    return %arg0, %c0_i32, %c0_i32_0, %c0_i32_1 : i32, i32, i32, i32
  }
}

</mosaic_0001>

<llo_original>
// kernel: tpu_custom_call.1
$region0: #{tpu_custom_call.1}
  #allocation0 [shape = 'u32[]', space=smem, size = 0x4, offset = 0x4, fixed_abs, tag = 'smem constant byte address 0x4 - core index']
  #allocation1 [shape = 'u32[144,128]{1,0:T(1,128)}', space=vmem, size = 0x12000, scoped, tag = 'internal scratch']
  %s0 = inlined_call_operand.vmem [shape: f32[2,4,256], index: 0, kind: input, shape index: {}]
  %s1 = inlined_call_operand.vmem [shape: f32[32,4], index: 1, kind: input, shape index: {}]
  %s2 = inlined_call_operand.vmem [shape: f32[32,1], index: 2, kind: input, shape index: {}]
  %s3 = inlined_call_operand.vmem [shape: f32[2,1,256], index: 3, kind: input, shape index: {}]
  %s4 = inlined_call_operand.vmem [shape: f32[2,32,32], index: 4, kind: input, shape index: {}]
  %s5 = inlined_call_operand.vmem [shape: f32[2,256,32], index: 5, kind: input, shape index: {}]
  %s6 = inlined_call_operand.vmem [shape: f32[2,1,32], index: 6, kind: input, shape index: {}]
  %s7 = inlined_call_operand.vmem [shape: f32[2,32,32], index: 7, kind: input, shape index: {}]
  %s8 = inlined_call_operand.vmem [shape: f32[2,1,32], index: 8, kind: input, shape index: {}]
  %s9 = inlined_call_operand.vmem [shape: f32[2,32,256], index: 9, kind: input, shape index: {}]
  %s10 = inlined_call_operand.vmem [shape: f32[2,1,256], index: 10, kind: input, shape index: {}]
  %s11 = inlined_call_operand.hbm [shape: f32[2,2,32], index: 11, kind: output, shape index: {0}]
  %s12 = inlined_call_operand.hbm [shape: f32[2,3,2,256], index: 12, kind: output, shape index: {1}]
  %13 = xla_tuple %s11, %s12
  %s14 = sld [smem:[#allocation0]]
  $region85: #{tpu_custom_call.1} parent=0
    _
  %s16 = ssub.s32 1, %s14
  %s17 = scalar_select 0, %s16, %s14
  $region1: #{tpu_custom_call.1} parent=0
    #allocation2 [shape = 'u8[2048]{0}', space=vmem, size = 0x800, scoped, tag = 'output window, operand 0']
    #allocation3 [shape = 's32[2]{0}', space=sflag, size = 0x8, scoped, tag = 'scoped memory for tpu_custom_call.1']
    #allocation4 [shape = 'u8[12288]{0}', space=vmem, size = 0x3000, scoped, tag = 'output window, operand 1']
    #allocation5 [shape = 's32[2]{0}', space=sflag, size = 0x8, scoped, tag = 'scoped memory for tpu_custom_call.1']
    %18 = vsyncpa [#allocation3], 0
    %s19 = scalar_lea.sflag [#allocation3], 1
    %20 = vsyncpa %s19, 0
    %21 = vsyncpa [#allocation5], 0
    %s22 = scalar_lea.sflag [#allocation5], 1
    %23 = vsyncpa %s22, 0
    loop: start=0, step=1, limit=4
    $region2: #{tpu_custom_call.1} parent=1 // loop_pre_header
      _
    $region3: #{tpu_custom_call.1} parent=1 // loop_header
      %s25 = sphi 0, %s29
      %p26 = scmp.ge.s32.totalorder %s25, 4
      %s33 = sphi 0, %s33
      %s35 = sphi 0, %s33
      %s36 = sphi 0, %s35
      %s50 = sphi 0, %s36
      %s54 = sphi 0, %s54
      %s56 = sphi 0, %s54
      %s57 = sphi 0, %s56
      %s71 = sphi 0, %s57
      %s75 = sphi 0, %s75
      %s77 = sphi 0, %s75
      %s78 = sphi 0, %s77
      %s92 = sphi 0, %s78
      %s98 = sphi 0, %s100
      %s101 = sphi 0, %s98
      %s102 = sphi 0, %s101
      %s118 = sphi 0, %s102
      %s124 = sphi 0, %s126
      %s127 = sphi 0, %s124
      %s128 = sphi 0, %s127
      %s144 = sphi 0, %s128
      %s150 = sphi 0, %s152
      %s153 = sphi 0, %s150
      %s154 = sphi 0, %s153
      %s170 = sphi 0, %s154
      %s176 = sphi 0, %s178
      %s179 = sphi 0, %s176
      %s180 = sphi 0, %s179
      %s196 = sphi 0, %s180
      %s202 = sphi 0, %s204
      %s205 = sphi 0, %s202
      %s206 = sphi 0, %s205
      %s222 = sphi 0, %s206
      %s228 = sphi 0, %s230
      %s231 = sphi 0, %s228
      %s232 = sphi 0, %s231
      %s248 = sphi 0, %s232
      %s254 = sphi 0, %s256
      %s257 = sphi 0, %s254
      %s258 = sphi 0, %s257
      %s274 = sphi 0, %s258
      %s280 = sphi 0, %s282
      %s283 = sphi 0, %s280
      %s284 = sphi 0, %s283
      %s300 = sphi 0, %s284
      %s306 = sphi 0, %s308
      %s309 = sphi 0, %s306
      %s310 = sphi 0, %s309
      %s326 = sphi 0, %s310
      %s332 = sphi 0, %s334
      %s335 = sphi 0, %s332
      %s336 = sphi 0, %s335
      %s352 = sphi 0, %s336
    $region4: #{tpu_custom_call.1} parent=1 // loop_header_branch
      %28 = sbr.rel (%p26) target = $region8
    $region5: #{tpu_custom_call.1} parent=1 // loop_body
      %s30 = ssub.s32 %s25, 1
      %s31 = ssub.s32 %s25, 2
      %s32 = sadd.s32 %s25, 1
      %s34 = sadd.s32 %s33, 1
      %p37 = scmp.eq.s32.totalorder %s25, 1
      %p38 = scmp.ne.s32.totalorder %s33, %s35
      %p39 = scmp.eq.s32.totalorder %s25, 0
      %p40 = por %p38, %p39
      %p41 = scmp.ne.s32.totalorder %s33, %s35
      %p42 = scmp.eq.s32.totalorder %s30, 1
      %p43 = por %p41, %p42
      %p44 = scmp.ne.s32.totalorder %s35, %s36
      %p45 = scmp.eq.s32.totalorder %s30, 0
      %p46 = por %p44, %p45
      %p47 = scmp.ne.s32.totalorder %s35, %s36
      %p48 = scmp.eq.s32.totalorder %s31, 1
      %p49 = por %p47, %p48
      %p51 = scmp.ne.s32.totalorder %s36, %s50
      %p52 = scmp.eq.s32.totalorder %s31, 0
      %p53 = por %p51, %p52
      %s55 = sadd.s32 %s54, 1
      %p58 = scmp.eq.s32.totalorder %s25, 1
      %p59 = scmp.ne.s32.totalorder %s54, %s56
      %p60 = scmp.eq.s32.totalorder %s25, 0
      %p61 = por %p59, %p60
      %p62 = scmp.ne.s32.totalorder %s54, %s56
      %p63 = scmp.eq.s32.totalorder %s30, 1
      %p64 = por %p62, %p63
      %p65 = scmp.ne.s32.totalorder %s56, %s57
      %p66 = scmp.eq.s32.totalorder %s30, 0
      %p67 = por %p65, %p66
      %p68 = scmp.ne.s32.totalorder %s56, %s57
      %p69 = scmp.eq.s32.totalorder %s31, 1
      %p70 = por %p68, %p69
      %p72 = scmp.ne.s32.totalorder %s57, %s71
      %p73 = scmp.eq.s32.totalorder %s31, 0
      %p74 = por %p72, %p73
      %s76 = sadd.s32 %s75, 1
      %p79 = scmp.eq.s32.totalorder %s25, 1
      %p80 = scmp.ne.s32.totalorder %s75, %s77
      %p81 = scmp.eq.s32.totalorder %s25, 0
      %p82 = por %p80, %p81
      %p83 = scmp.ne.s32.totalorder %s75, %s77
      %p84 = scmp.eq.s32.totalorder %s30, 1
      %p85 = por %p83, %p84
      %p86 = scmp.ne.s32.totalorder %s77, %s78
      %p87 = scmp.eq.s32.totalorder %s30, 0
      %p88 = por %p86, %p87
      %p89 = scmp.ne.s32.totalorder %s77, %s78
      %p90 = scmp.eq.s32.totalorder %s31, 1
      %p91 = por %p89, %p90
      %p93 = scmp.ne.s32.totalorder %s78, %s92
      %p94 = scmp.eq.s32.totalorder %s31, 0
      %p95 = por %p93, %p94
      %s96 = ssub.s32 %s25, %s32
      %p97 = scmp.eq.s32.totalorder %s96, 0
      %s99 = sadd.s32 %s98, 1
      %s100 = scalar_select %p97, %s98, %s99
      %p103 = pneg %p97
      %p104 = scmp.eq.s32.totalorder %s25, 1
      %p105 = por %p103, %p104
      %p106 = scmp.ne.s32.totalorder %s98, %s101
      %p107 = scmp.eq.s32.totalorder %s25, 0
      %p108 = por %p106, %p107
      %p109 = scmp.ne.s32.totalorder %s98, %s101
      %p110 = scmp.eq.s32.totalorder %s30, 1
      %p111 = por %p109, %p110
      %p112 = scmp.ne.s32.totalorder %s101, %s102
      %p113 = scmp.eq.s32.totalorder %s30, 0
      %p114 = por %p112, %p113
      %p115 = scmp.ne.s32.totalorder %s101, %s102
      %p116 = scmp.eq.s32.totalorder %s31, 1
      %p117 = por %p115, %p116
      %p119 = scmp.ne.s32.totalorder %s102, %s118
      %p120 = scmp.eq.s32.totalorder %s31, 0
      %p121 = por %p119, %p120
      %s122 = ssub.s32 %s25, %s32
      %p123 = scmp.eq.s32.totalorder %s122, 0
      %s125 = sadd.s32 %s124, 1
      %s126 = scalar_select %p123, %s124, %s125
      %p129 = pneg %p123
      %p130 = scmp.eq.s32.totalorder %s25, 1
      %p131 = por %p129, %p130
      %p132 = scmp.ne.s32.totalorder %s124, %s127
      %p133 = scmp.eq.s32.totalorder %s25, 0
      %p134 = por %p132, %p133
      %p135 = scmp.ne.s32.totalorder %s124, %s127
      %p136 = scmp.eq.s32.totalorder %s30, 1
      %p137 = por %p135, %p136
      %p138 = scmp.ne.s32.totalorder %s127, %s128
      %p139 = scmp.eq.s32.totalorder %s30, 0
      %p140 = por %p138, %p139
      %p141 = scmp.ne.s32.totalorder %s127, %s128
      %p142 = scmp.eq.s32.totalorder %s31, 1
      %p143 = por %p141, %p142
      %p145 = scmp.ne.s32.totalorder %s128, %s144
      %p146 = scmp.eq.s32.totalorder %s31, 0
      %p147 = por %p145, %p146
      %s148 = ssub.s32 %s25, %s32
      %p149 = scmp.eq.s32.totalorder %s148, 0
      %s151 = sadd.s32 %s150, 1
      %s152 = scalar_select %p149, %s150, %s151
      %p155 = pneg %p149
      %p156 = scmp.eq.s32.totalorder %s25, 1
      %p157 = por %p155, %p156
      %p158 = scmp.ne.s32.totalorder %s150, %s153
      %p159 = scmp.eq.s32.totalorder %s25, 0
      %p160 = por %p158, %p159
      %p161 = scmp.ne.s32.totalorder %s150, %s153
      %p162 = scmp.eq.s32.totalorder %s30, 1
      %p163 = por %p161, %p162
      %p164 = scmp.ne.s32.totalorder %s153, %s154
      %p165 = scmp.eq.s32.totalorder %s30, 0
      %p166 = por %p164, %p165
      %p167 = scmp.ne.s32.totalorder %s153, %s154
      %p168 = scmp.eq.s32.totalorder %s31, 1
      %p169 = por %p167, %p168
      %p171 = scmp.ne.s32.totalorder %s154, %s170
      %p172 = scmp.eq.s32.totalorder %s31, 0
      %p173 = por %p171, %p172
      %s174 = ssub.s32 %s25, %s32
      %p175 = scmp.eq.s32.totalorder %s174, 0
      %s177 = sadd.s32 %s176, 1
      %s178 = scalar_select %p175, %s176, %s177
      %p181 = pneg %p175
      %p182 = scmp.eq.s32.totalorder %s25, 1
      %p183 = por %p181, %p182
      %p184 = scmp.ne.s32.totalorder %s176, %s179
      %p185 = scmp.eq.s32.totalorder %s25, 0
      %p186 = por %p184, %p185
      %p187 = scmp.ne.s32.totalorder %s176, %s179
      %p188 = scmp.eq.s32.totalorder %s30, 1
      %p189 = por %p187, %p188
      %p190 = scmp.ne.s32.totalorder %s179, %s180
      %p191 = scmp.eq.s32.totalorder %s30, 0
      %p192 = por %p190, %p191
      %p193 = scmp.ne.s32.totalorder %s179, %s180
      %p194 = scmp.eq.s32.totalorder %s31, 1
      %p195 = por %p193, %p194
      %p197 = scmp.ne.s32.totalorder %s180, %s196
      %p198 = scmp.eq.s32.totalorder %s31, 0
      %p199 = por %p197, %p198
      %s200 = ssub.s32 %s25, %s32
      %p201 = scmp.eq.s32.totalorder %s200, 0
      %s203 = sadd.s32 %s202, 1
      %s204 = scalar_select %p201, %s202, %s203
      %p207 = pneg %p201
      %p208 = scmp.eq.s32.totalorder %s25, 1
      %p209 = por %p207, %p208
      %p210 = scmp.ne.s32.totalorder %s202, %s205
      %p211 = scmp.eq.s32.totalorder %s25, 0
      %p212 = por %p210, %p211
      %p213 = scmp.ne.s32.totalorder %s202, %s205
      %p214 = scmp.eq.s32.totalorder %s30, 1
      %p215 = por %p213, %p214
      %p216 = scmp.ne.s32.totalorder %s205, %s206
      %p217 = scmp.eq.s32.totalorder %s30, 0
      %p218 = por %p216, %p217
      %p219 = scmp.ne.s32.totalorder %s205, %s206
      %p220 = scmp.eq.s32.totalorder %s31, 1
      %p221 = por %p219, %p220
      %p223 = scmp.ne.s32.totalorder %s206, %s222
      %p224 = scmp.eq.s32.totalorder %s31, 0
      %p225 = por %p223, %p224
      %s226 = ssub.s32 %s25, %s32
      %p227 = scmp.eq.s32.totalorder %s226, 0
      %s229 = sadd.s32 %s228, 1
      %s230 = scalar_select %p227, %s228, %s229
      %p233 = pneg %p227
      %p234 = scmp.eq.s32.totalorder %s25, 1
      %p235 = por %p233, %p234
      %p236 = scmp.ne.s32.totalorder %s228, %s231
      %p237 = scmp.eq.s32.totalorder %s25, 0
      %p238 = por %p236, %p237
      %p239 = scmp.ne.s32.totalorder %s228, %s231
      %p240 = scmp.eq.s32.totalorder %s30, 1
      %p241 = por %p239, %p240
      %p242 = scmp.ne.s32.totalorder %s231, %s232
      %p243 = scmp.eq.s32.totalorder %s30, 0
      %p244 = por %p242, %p243
      %p245 = scmp.ne.s32.totalorder %s231, %s232
      %p246 = scmp.eq.s32.totalorder %s31, 1
      %p247 = por %p245, %p246
      %p249 = scmp.ne.s32.totalorder %s232, %s248
      %p250 = scmp.eq.s32.totalorder %s31, 0
      %p251 = por %p249, %p250
      %s252 = ssub.s32 %s25, %s32
      %p253 = scmp.eq.s32.totalorder %s252, 0
      %s255 = sadd.s32 %s254, 1
      %s256 = scalar_select %p253, %s254, %s255
      %p259 = pneg %p253
      %p260 = scmp.eq.s32.totalorder %s25, 1
      %p261 = por %p259, %p260
      %p262 = scmp.ne.s32.totalorder %s254, %s257
      %p263 = scmp.eq.s32.totalorder %s25, 0
      %p264 = por %p262, %p263
      %p265 = scmp.ne.s32.totalorder %s254, %s257
      %p266 = scmp.eq.s32.totalorder %s30, 1
      %p267 = por %p265, %p266
      %p268 = scmp.ne.s32.totalorder %s257, %s258
      %p269 = scmp.eq.s32.totalorder %s30, 0
      %p270 = por %p268, %p269
      %p271 = scmp.ne.s32.totalorder %s257, %s258
      %p272 = scmp.eq.s32.totalorder %s31, 1
      %p273 = por %p271, %p272
      %p275 = scmp.ne.s32.totalorder %s258, %s274
      %p276 = scmp.eq.s32.totalorder %s31, 0
      %p277 = por %p275, %p276
      %s278 = ssub.s32 %s25, %s32
      %p279 = scmp.eq.s32.totalorder %s278, 0
      %s281 = sadd.s32 %s280, 1
      %s282 = scalar_select %p279, %s280, %s281
      %p285 = pneg %p279
      %p286 = scmp.eq.s32.totalorder %s25, 1
      %p287 = por %p285, %p286
      %p288 = scmp.ne.s32.totalorder %s280, %s283
      %p289 = scmp.eq.s32.totalorder %s25, 0
      %p290 = por %p288, %p289
      %p291 = scmp.ne.s32.totalorder %s280, %s283
      %p292 = scmp.eq.s32.totalorder %s30, 1
      %p293 = por %p291, %p292
      %p294 = scmp.ne.s32.totalorder %s283, %s284
      %p295 = scmp.eq.s32.totalorder %s30, 0
      %p296 = por %p294, %p295
      %p297 = scmp.ne.s32.totalorder %s283, %s284
      %p298 = scmp.eq.s32.totalorder %s31, 1
      %p299 = por %p297, %p298
      %p301 = scmp.ne.s32.totalorder %s284, %s300
      %p302 = scmp.eq.s32.totalorder %s31, 0
      %p303 = por %p301, %p302
      %s304 = ssub.s32 %s25, %s32
      %p305 = scmp.eq.s32.totalorder %s304, 0
      %s307 = sadd.s32 %s306, 1
      %s308 = scalar_select %p305, %s306, %s307
      %p311 = pneg %p305
      %p312 = scmp.eq.s32.totalorder %s25, 1
      %p313 = por %p311, %p312
      %p314 = scmp.ne.s32.totalorder %s306, %s309
      %p315 = scmp.eq.s32.totalorder %s25, 0
      %p316 = por %p314, %p315
      %p317 = scmp.ne.s32.totalorder %s306, %s309
      %p318 = scmp.eq.s32.totalorder %s30, 1
      %p319 = por %p317, %p318
      %p320 = scmp.ne.s32.totalorder %s309, %s310
      %p321 = scmp.eq.s32.totalorder %s30, 0
      %p322 = por %p320, %p321
      %p323 = scmp.ne.s32.totalorder %s309, %s310
      %p324 = scmp.eq.s32.totalorder %s31, 1
      %p325 = por %p323, %p324
      %p327 = scmp.ne.s32.totalorder %s310, %s326
      %p328 = scmp.eq.s32.totalorder %s31, 0
      %p329 = por %p327, %p328
      %s330 = ssub.s32 %s25, %s32
      %p331 = scmp.eq.s32.totalorder %s330, 0
      %s333 = sadd.s32 %s332, 1
      %s334 = scalar_select %p331, %s332, %s333
      %p337 = pneg %p331
      %p338 = scmp.eq.s32.totalorder %s25, 1
      %p339 = por %p337, %p338
      %p340 = scmp.ne.s32.totalorder %s332, %s335
      %p341 = scmp.eq.s32.totalorder %s25, 0
      %p342 = por %p340, %p341
      %p343 = scmp.ne.s32.totalorder %s332, %s335
      %p344 = scmp.eq.s32.totalorder %s30, 1
      %p345 = por %p343, %p344
      %p346 = scmp.ne.s32.totalorder %s335, %s336
      %p347 = scmp.eq.s32.totalorder %s30, 0
      %p348 = por %p346, %p347
      %p349 = scmp.ne.s32.totalorder %s335, %s336
      %p350 = scmp.eq.s32.totalorder %s31, 1
      %p351 = por %p349, %p350
      %p353 = scmp.ne.s32.totalorder %s336, %s352
      %p354 = scmp.eq.s32.totalorder %s31, 0
      %p355 = por %p353, %p354
      %p356 = scmp.le.s32.totalorder 1, %s25
      %p357 = scmp.lt.s32.totalorder %s25, 3
      %p358 = pnand %p356, %p357
      %p359 = pneg %p358
      // Predicated region
      $region9: #{tpu_custom_call.1} parent=5 // pred_check
        _
      $region10: #{tpu_custom_call.1} parent=5 // pred_check_branch
        %361 = sbr.rel (%p358) target = $region12
      $region11: #{tpu_custom_call.1} parent=5 // pred_region
        %s362 = ssub.s32 %s25, 1
        // Predicated region
        $region13: #{tpu_custom_call.1} parent=11 // pred_check
          %p363 = pneg %p46
        $region14: #{tpu_custom_call.1} parent=11 // pred_check_branch
          %365 = sbr.rel (%p363) target = $region16
        $region15: #{tpu_custom_call.1} parent=11 // pred_region
          _
        $region16: #{tpu_custom_call.1} parent=11 // pred_fallthru
          _
        // Predicated region
        $region17: #{tpu_custom_call.1} parent=11 // pred_check
          %p366 = pneg %p67
        $region18: #{tpu_custom_call.1} parent=11 // pred_check_branch
          %368 = sbr.rel (%p366) target = $region20
        $region19: #{tpu_custom_call.1} parent=11 // pred_region
          _
        $region20: #{tpu_custom_call.1} parent=11 // pred_fallthru
          _
        // Predicated region
        $region21: #{tpu_custom_call.1} parent=11 // pred_check
          %p369 = pneg %p88
        $region22: #{tpu_custom_call.1} parent=11 // pred_check_branch
          %371 = sbr.rel (%p369) target = $region24
        $region23: #{tpu_custom_call.1} parent=11 // pred_region
          _
        $region24: #{tpu_custom_call.1} parent=11 // pred_fallthru
          _
      $region12: #{tpu_custom_call.1} parent=5 // pred_fallthru
        _
      %p372 = scmp.lt.s32.totalorder %s25, 2
      // Predicated region
      $region25: #{tpu_custom_call.1} parent=5 // pred_check
        %p373 = pneg %p372
      $region26: #{tpu_custom_call.1} parent=5 // pred_check_branch
        %375 = sbr.rel (%p373) target = $region28
      $region27: #{tpu_custom_call.1} parent=5 // pred_region
        // Predicated region
        $region29: #{tpu_custom_call.1} parent=27 // pred_check
          %p376 = pneg %p108
        $region30: #{tpu_custom_call.1} parent=27 // pred_check_branch
          %378 = sbr.rel (%p376) target = $region32
        $region31: #{tpu_custom_call.1} parent=27 // pred_region
          %p379 = scmp.lt.s32.totalorder %s25, 1
          %s380 = scalar_select %p379, %s25, 1
          %s381 = smul.addr %s380, 2
          %s382 = scalar_lea.vmem %s3, %s381
        $region32: #{tpu_custom_call.1} parent=27 // pred_fallthru
          _
        // Predicated region
        $region33: #{tpu_custom_call.1} parent=27 // pred_check
          %p383 = pneg %p134
        $region34: #{tpu_custom_call.1} parent=27 // pred_check_branch
          %385 = sbr.rel (%p383) target = $region36
        $region35: #{tpu_custom_call.1} parent=27 // pred_region
          %p386 = scmp.lt.s32.totalorder %s25, 1
          %s387 = scalar_select %p386, %s25, 1
          %s388 = smul.addr %s387, 4
          %s389 = smul.addr %s388, 8
          %s390 = scalar_lea.vmem %s4, %s389
        $region36: #{tpu_custom_call.1} parent=27 // pred_fallthru
          _
        // Predicated region
        $region37: #{tpu_custom_call.1} parent=27 // pred_check
          %p391 = pneg %p160
        $region38: #{tpu_custom_call.1} parent=27 // pred_check_branch
          %393 = sbr.rel (%p391) target = $region40
        $region39: #{tpu_custom_call.1} parent=27 // pred_region
          %p394 = scmp.lt.s32.totalorder %s25, 1
          %s395 = scalar_select %p394, %s25, 1
          %s396 = smul.addr %s395, 32
          %s397 = smul.addr %s396, 8
          %s398 = scalar_lea.vmem %s5, %s397
        $region40: #{tpu_custom_call.1} parent=27 // pred_fallthru
          _
        // Predicated region
        $region41: #{tpu_custom_call.1} parent=27 // pred_check
          %p399 = pneg %p186
        $region42: #{tpu_custom_call.1} parent=27 // pred_check_branch
          %401 = sbr.rel (%p399) target = $region44
        $region43: #{tpu_custom_call.1} parent=27 // pred_region
          %p402 = scmp.lt.s32.totalorder %s25, 1
          %s403 = scalar_select %p402, %s25, 1
          %s404 = scalar_lea.vmem %s6, %s403
        $region44: #{tpu_custom_call.1} parent=27 // pred_fallthru
          _
        // Predicated region
        $region45: #{tpu_custom_call.1} parent=27 // pred_check
          %p405 = pneg %p212
        $region46: #{tpu_custom_call.1} parent=27 // pred_check_branch
          %407 = sbr.rel (%p405) target = $region48
        $region47: #{tpu_custom_call.1} parent=27 // pred_region
          %p408 = scmp.lt.s32.totalorder %s25, 1
          %s409 = scalar_select %p408, %s25, 1
          %s410 = smul.addr %s409, 4
          %s411 = smul.addr %s410, 8
          %s412 = scalar_lea.vmem %s7, %s411
        $region48: #{tpu_custom_call.1} parent=27 // pred_fallthru
          _
        // Predicated region
        $region49: #{tpu_custom_call.1} parent=27 // pred_check
          %p413 = pneg %p238
        $region50: #{tpu_custom_call.1} parent=27 // pred_check_branch
          %415 = sbr.rel (%p413) target = $region52
        $region51: #{tpu_custom_call.1} parent=27 // pred_region
          %p416 = scmp.lt.s32.totalorder %s25, 1
          %s417 = scalar_select %p416, %s25, 1
          %s418 = scalar_lea.vmem %s8, %s417
        $region52: #{tpu_custom_call.1} parent=27 // pred_fallthru
          _
        // Predicated region
        $region53: #{tpu_custom_call.1} parent=27 // pred_check
          %p419 = pneg %p264
        $region54: #{tpu_custom_call.1} parent=27 // pred_check_branch
          %421 = sbr.rel (%p419) target = $region56
        $region55: #{tpu_custom_call.1} parent=27 // pred_region
          %p422 = scmp.lt.s32.totalorder %s25, 1
          %s423 = scalar_select %p422, %s25, 1
          %s424 = smul.addr %s423, 8
          %s425 = smul.addr %s424, 8
          %s426 = scalar_lea.vmem %s9, %s425
        $region56: #{tpu_custom_call.1} parent=27 // pred_fallthru
          _
        // Predicated region
        $region57: #{tpu_custom_call.1} parent=27 // pred_check
          %p427 = pneg %p290
        $region58: #{tpu_custom_call.1} parent=27 // pred_check_branch
          %429 = sbr.rel (%p427) target = $region60
        $region59: #{tpu_custom_call.1} parent=27 // pred_region
          %p430 = scmp.lt.s32.totalorder %s25, 1
          %s431 = scalar_select %p430, %s25, 1
          %s432 = smul.addr %s431, 2
          %s433 = scalar_lea.vmem %s10, %s432
        $region60: #{tpu_custom_call.1} parent=27 // pred_fallthru
          _
      $region28: #{tpu_custom_call.1} parent=5 // pred_fallthru
        _
      %p434 = scmp.le.s32.totalorder 1, %s25
      %p435 = scmp.lt.s32.totalorder %s25, 3
      %p436 = pnand %p434, %p435
      %p437 = pneg %p436
      // Predicated region
      $region61: #{tpu_custom_call.1} parent=5 // pred_check
        _
      $region62: #{tpu_custom_call.1} parent=5 // pred_check_branch
        %439 = sbr.rel (%p436) target = $region64
      $region63: #{tpu_custom_call.1} parent=5 // pred_region
        %s440 = ssub.s32 %s25, 1
        %p441 = pneg %p46
        %p442 = pneg %p43
        %p443 = pneg %p67
        %p444 = pneg %p64
        %p445 = pneg %p88
        %p446 = pneg %p85
        %p447 = scmp.lt.s32.totalorder %s30, 1
        %s448 = scalar_select %p447, %s30, 1
        %s449 = smul.addr %s448, 2
        %s450 = scalar_lea.vmem %s3, %s449
        %p451 = pneg %p114
        %p452 = pneg %p111
        %p453 = scmp.lt.s32.totalorder %s30, 1
        %s454 = scalar_select %p453, %s30, 1
        %s455 = smul.addr %s454, 4
        %s456 = smul.addr %s455, 8
        %s457 = scalar_lea.vmem %s4, %s456
        %p458 = pneg %p140
        %p459 = pneg %p137
        %p460 = scmp.lt.s32.totalorder %s30, 1
        %s461 = scalar_select %p460, %s30, 1
        %s462 = smul.addr %s461, 32
        %s463 = smul.addr %s462, 8
        %s464 = scalar_lea.vmem %s5, %s463
        %p465 = pneg %p166
        %p466 = pneg %p163
        %p467 = scmp.lt.s32.totalorder %s30, 1
        %s468 = scalar_select %p467, %s30, 1
        %s469 = scalar_lea.vmem %s6, %s468
        %p470 = pneg %p192
        %p471 = pneg %p189
        %p472 = scmp.lt.s32.totalorder %s30, 1
        %s473 = scalar_select %p472, %s30, 1
        %s474 = smul.addr %s473, 4
        %s475 = smul.addr %s474, 8
        %s476 = scalar_lea.vmem %s7, %s475
        %p477 = pneg %p218
        %p478 = pneg %p215
        %p479 = scmp.lt.s32.totalorder %s30, 1
        %s480 = scalar_select %p479, %s30, 1
        %s481 = scalar_lea.vmem %s8, %s480
        %p482 = pneg %p244
        %p483 = pneg %p241
        %p484 = scmp.lt.s32.totalorder %s30, 1
        %s485 = scalar_select %p484, %s30, 1
        %s486 = smul.addr %s485, 8
        %s487 = smul.addr %s486, 8
        %s488 = scalar_lea.vmem %s9, %s487
        %p489 = pneg %p270
        %p490 = pneg %p267
        %p491 = scmp.lt.s32.totalorder %s30, 1
        %s492 = scalar_select %p491, %s30, 1
        %s493 = smul.addr %s492, 2
        %s494 = scalar_lea.vmem %s10, %s493
        %p495 = pneg %p296
        %p496 = pneg %p293
        %p497 = pneg %p322
        %p498 = pneg %p319
        %s499 = sand.u32 %s309, 1
        %s500 = scalar_lea.sflag [#allocation3], %s499
        %s501 = sand.u32 %s309, 1
        %s502 = smul.addr %s501, 2
        %s503 = scalar_lea.vmem [#allocation2], %s502
        %p504 = pneg %p348
        %p505 = pneg %p345
        %s506 = sand.u32 %s335, 1
        %s507 = scalar_lea.sflag [#allocation5], %s506
        %s508 = sand.u32 %s335, 1
        %s509 = smul.addr %s508, 12
        %s510 = scalar_lea.vmem [#allocation4], %s509
        %p511 = scmp.lt.s32.totalorder %s30, 1
        %s512 = scalar_select %p511, %s30, 1
        %s513 = smul.addr %s512, 2
        %s514 = scalar_lea.vmem %s3, %s513
        %p515 = scmp.lt.s32.totalorder %s30, 1
        %s516 = scalar_select %p515, %s30, 1
        %s517 = smul.addr %s516, 4
        %s518 = smul.addr %s517, 8
        %s519 = scalar_lea.vmem %s4, %s518
        %p520 = scmp.lt.s32.totalorder %s30, 1
        %s521 = scalar_select %p520, %s30, 1
        %s522 = smul.addr %s521, 32
        %s523 = smul.addr %s522, 8
        %s524 = scalar_lea.vmem %s5, %s523
        %p525 = scmp.lt.s32.totalorder %s30, 1
        %s526 = scalar_select %p525, %s30, 1
        %s527 = scalar_lea.vmem %s6, %s526
        %p528 = scmp.lt.s32.totalorder %s30, 1
        %s529 = scalar_select %p528, %s30, 1
        %s530 = smul.addr %s529, 4
        %s531 = smul.addr %s530, 8
        %s532 = scalar_lea.vmem %s7, %s531
        %p533 = scmp.lt.s32.totalorder %s30, 1
        %s534 = scalar_select %p533, %s30, 1
        %s535 = scalar_lea.vmem %s8, %s534
        %p536 = scmp.lt.s32.totalorder %s30, 1
        %s537 = scalar_select %p536, %s30, 1
        %s538 = smul.addr %s537, 8
        %s539 = smul.addr %s538, 8
        %s540 = scalar_lea.vmem %s9, %s539
        %p541 = scmp.lt.s32.totalorder %s30, 1
        %s542 = scalar_select %p541, %s30, 1
        %s543 = smul.addr %s542, 2
        %s544 = scalar_lea.vmem %s10, %s543
        %v545 = vld [vmem:[%s1] sm:$0xff]
        %v546 = vld [vmem:[%s1 + $0x8] sm:$0xff]
        %v547 = vld [vmem:[%s1 + $0x10] sm:$0xff]
        %v548 = vld [vmem:[%s1 + $0x18] sm:$0xff]
        %v549 = vld [vmem:[%s2] sm:$0xff]
        %v550 = vld [vmem:[%s2 + $0x8] sm:$0xff]
        %v551 = vld [vmem:[%s2 + $0x10] sm:$0xff]
        %v552 = vld [vmem:[%s2 + $0x18] sm:$0xff]
        %v553 = vld [vmem:[%s0] sm:$0xff]
        %555 = vset.pattern.permute.xlu0 0
        %556 = vperm.xlu0 %555, %v549
        %v557 = vpop.permute.xlu0 %556
        %560 = vset.pattern.permute.xlu0 0
        %561 = vperm.xlu0 %560, %v550
        %v562 = vpop.permute.xlu0 %561
        %565 = vset.pattern.permute.xlu0 0
        %566 = vperm.xlu0 %565, %v551
        %v567 = vpop.permute.xlu0 %566
        %570 = vset.pattern.permute.xlu0 0
        %571 = vperm.xlu0 %570, %v552
        %v572 = vpop.permute.xlu0 %571
        %v575 = vcombine.high %v553, %v553
        %vm576 = vcmask 31744
        %v578 = vsel %vm576, %v545, 0
        %v581 = vsel %vm576, %v546, 0
        %v584 = vsel %vm576, %v547, 0
        %v587 = vsel %vm576, %v548, 0
        %vm589 = vcmask 1043456
        %v590 = vsel %vm589, %v553, 0
        %v592 = vsel %vm589, %v575, 0
        %594 = vmatprep.subr.mxu0 %v592
        %595 = vmatpush1.msra.mxu0 %v590
        %596 = vmatprep.subr.mxu0 0.0
        %597 = vmatpush1.msra.mxu0 0.0
        %598 = vmatprep.subr.mxu0 0.0
        %599 = vmatpush1.msra.mxu0 0.0
        %600 = vmatprep.subr.mxu0 0.0
        %601 = vmatpush1.msra.mxu0 0.0
        %602 = vmatprep.subr.mxu0 0.0
        %603 = vmatpush1.msra.mxu0 0.0
        %604 = vmatprep.subr.mxu0 0.0
        %605 = vmatpush1.msra.mxu0 0.0
        %606 = vmatprep.subr.mxu0 0.0
        %607 = vmatpush1.msra.mxu0 0.0
        %608 = vmatprep.subr.mxu0 0.0
        %609 = vmatpush1.msra.mxu0 0.0
        %610 = vmatprep.subr.mxu0 0.0
        %611 = vmatpush1.msra.mxu0 0.0
        %612 = vmatprep.subr.mxu0 0.0
        %613 = vmatpush1.msra.mxu0 0.0
        %614 = vmatprep.subr.mxu0 0.0
        %615 = vmatpush1.msra.mxu0 0.0
        %616 = vmatprep.subr.mxu0 0.0
        %617 = vmatpush1.msra.mxu0 0.0
        %618 = vmatprep.subr.mxu0 0.0
        %619 = vmatpush1.msra.mxu0 0.0
        %620 = vmatprep.subr.mxu0 0.0
        %621 = vmatpush1.msra.mxu0 0.0
        %622 = vmatprep.subr.mxu0 0.0
        %623 = vmatpush1.msra.mxu0 0.0
        %624 = vmatprep.subr.mxu0 0.0
        %625 = vmatpush1.msra.mxu0 0.0
        %626 = vmatprep.subr.mxu0 0.0
        %627 = vmatpush1.msra.mxu0 0.0
        %628 = vmatprep.subr.mxu0 0.0
        %629 = vmatpush1.msra.mxu0 0.0
        %630 = vmatprep.subr.mxu0 0.0
        %631 = vmatpush1.msra.mxu0 0.0
        %632 = vmatprep.subr.mxu0 0.0
        %633 = vmatpush1.msra.mxu0 0.0
        %634 = vmatprep.subr.mxu0 0.0
        %635 = vmatpush1.msra.mxu0 0.0
        %636 = vmatprep.subr.mxu0 0.0
        %637 = vmatpush1.msra.mxu0 0.0
        %638 = vmatprep.subr.mxu0 0.0
        %639 = vmatpush1.msra.mxu0 0.0
        %640 = vmatprep.subr.mxu0 0.0
        %641 = vmatpush1.msra.mxu0 0.0
        %642 = vmatprep.subr.mxu0 0.0
        %643 = vmatpush1.msra.mxu0 0.0
        %644 = vmatprep.subr.mxu0 0.0
        %645 = vmatpush1.msra.mxu0 0.0
        %646 = vmatprep.subr.mxu0 0.0
        %647 = vmatpush1.msra.mxu0 0.0
        %648 = vmatprep.subr.mxu0 0.0
        %649 = vmatpush1.msra.mxu0 0.0
        %650 = vmatprep.subr.mxu0 0.0
        %651 = vmatpush1.msra.mxu0 0.0
        %652 = vmatprep.subr.mxu0 0.0
        %653 = vmatpush1.msra.mxu0 0.0
        %654 = vmatprep.subr.mxu0 0.0
        %655 = vmatpush1.msra.mxu0 0.0
        %656 = vmatprep.subr.mxu0 0.0
        %657 = vmatpush1.msra.mxu0 0.0
        %658 = vmatprep.mubr.f32.mxu0 0.0
        %659 = vmatmul.mubr.f32.gmra.mrb[0].mxu0 %v578
        %v660 = vpop.f32.mrb[0].mxu0
        %v661 = vadd.f32 %v557, %v660
        %v662 = vpop.f32.mrb[0].mxu0
        %v663 = vadd.f32 %v557, %v662
        %664 = vmatprep.mubr.f32.mxu0 0.0
        %665 = vmatmul.mubr.f32.gmra.mrb[0].mxu0 %v581
        %v666 = vpop.f32.mrb[0].mxu0
        %v667 = vadd.f32 %v562, %v666
        %v668 = vpop.f32.mrb[0].mxu0
        %v669 = vadd.f32 %v562, %v668
        %670 = vmatprep.mubr.f32.mxu0 0.0
        %671 = vmatmul.mubr.f32.gmra.mrb[0].mxu0 %v584
        %v672 = vpop.f32.mrb[0].mxu0
        %v673 = vadd.f32 %v567, %v672
        %v674 = vpop.f32.mrb[0].mxu0
        %v675 = vadd.f32 %v567, %v674
        %676 = vmatprep.mubr.f32.mxu0 0.0
        %677 = vmatmul.mubr.f32.gmra.mrb[0].mxu0 %v587
        %v678 = vpop.f32.mrb[0].mxu0
        %v679 = vadd.f32 %v572, %v678
        %v680 = vpop.f32.mrb[0].mxu0
        %v681 = vadd.f32 %v572, %v680
        %682 = vdwg.mxu0
        %v683 = vmax.f32 %v661, 0.0
        %v684 = vmax.f32 %v663, 0.0
        %v685 = vmax.f32 %v667, 0.0
        %v686 = vmax.f32 %v669, 0.0
        %v687 = vmax.f32 %v673, 0.0
        %v688 = vmax.f32 %v675, 0.0
        %v689 = vmax.f32 %v679, 0.0
        %v690 = vmax.f32 %v681, 0.0
        %v691 = vadd.f32 %v683, %v684
        %692 = vadd.xlane.f32.xlu0 %v691
        %v693 = vpop.xlane.xlu0 %692
        %v694 = vadd.f32 %v685, %v686
        %695 = vadd.xlane.f32.xlu0 %v694
        %v696 = vpop.xlane.xlu0 %695
        %v697 = vadd.f32 %v687, %v688
        %698 = vadd.xlane.f32.xlu0 %v697
        %v699 = vpop.xlane.xlu0 %698
        %v700 = vadd.f32 %v689, %v690
        %701 = vadd.xlane.f32.xlu0 %v700
        %v702 = vpop.xlane.xlu0 %701
        %v703 = vrcp.pop 256.0
        %v704 = vmul.f32 %v693, %v703
        %v705 = vmul.f32 %v696, %v703
        %v706 = vmul.f32 %v699, %v703
        %v707 = vmul.f32 %v702, %v703
        %s708 = scalar_lea.vmem %s0, 8
        %v709 = vld [vmem:[%s708] sm:$0xff]
        %v711 = vcombine.high %v709, %v709
        %v712 = vsel %vm589, %v709, 0
        %v714 = vsel %vm589, %v711, 0
        %716 = vmatprep.subr.mxu0 %v714
        %717 = vmatpush1.msra.mxu0 %v712
        %718 = vmatprep.subr.mxu0 0.0
        %719 = vmatpush1.msra.mxu0 0.0
        %720 = vmatprep.subr.mxu0 0.0
        %721 = vmatpush1.msra.mxu0 0.0
        %722 = vmatprep.subr.mxu0 0.0
        %723 = vmatpush1.msra.mxu0 0.0
        %724 = vmatprep.subr.mxu0 0.0
        %725 = vmatpush1.msra.mxu0 0.0
        %726 = vmatprep.subr.mxu0 0.0
        %727 = vmatpush1.msra.mxu0 0.0
        %728 = vmatprep.subr.mxu0 0.0
        %729 = vmatpush1.msra.mxu0 0.0
        %730 = vmatprep.subr.mxu0 0.0
        %731 = vmatpush1.msra.mxu0 0.0
        %732 = vmatprep.subr.mxu0 0.0
        %733 = vmatpush1.msra.mxu0 0.0
        %734 = vmatprep.subr.mxu0 0.0
        %735 = vmatpush1.msra.mxu0 0.0
        %736 = vmatprep.subr.mxu0 0.0
        %737 = vmatpush1.msra.mxu0 0.0
        %738 = vmatprep.subr.mxu0 0.0
        %739 = vmatpush1.msra.mxu0 0.0
        %740 = vmatprep.subr.mxu0 0.0
        %741 = vmatpush1.msra.mxu0 0.0
        %742 = vmatprep.subr.mxu0 0.0
        %743 = vmatpush1.msra.mxu0 0.0
        %744 = vmatprep.subr.mxu0 0.0
        %745 = vmatpush1.msra.mxu0 0.0
        %746 = vmatprep.subr.mxu0 0.0
        %747 = vmatpush1.msra.mxu0 0.0
        %748 = vmatprep.subr.mxu0 0.0
        %749 = vmatpush1.msra.mxu0 0.0
        %750 = vmatprep.subr.mxu0 0.0
        %751 = vmatpush1.msra.mxu0 0.0
        %752 = vmatprep.subr.mxu0 0.0
        %753 = vmatpush1.msra.mxu0 0.0
        %754 = vmatprep.subr.mxu0 0.0
        %755 = vmatpush1.msra.mxu0 0.0
        %756 = vmatprep.subr.mxu0 0.0
        %757 = vmatpush1.msra.mxu0 0.0
        %758 = vmatprep.subr.mxu0 0.0
        %759 = vmatpush1.msra.mxu0 0.0
        %760 = vmatprep.subr.mxu0 0.0
        %761 = vmatpush1.msra.mxu0 0.0
        %762 = vmatprep.subr.mxu0 0.0
        %763 = vmatpush1.msra.mxu0 0.0
        %764 = vmatprep.subr.mxu0 0.0
        %765 = vmatpush1.msra.mxu0 0.0
        %766 = vmatprep.subr.mxu0 0.0
        %767 = vmatpush1.msra.mxu0 0.0
        %768 = vmatprep.subr.mxu0 0.0
        %769 = vmatpush1.msra.mxu0 0.0
        %770 = vmatprep.subr.mxu0 0.0
        %771 = vmatpush1.msra.mxu0 0.0
        %772 = vmatprep.subr.mxu0 0.0
        %773 = vmatpush1.msra.mxu0 0.0
        %774 = vmatprep.subr.mxu0 0.0
        %775 = vmatpush1.msra.mxu0 0.0
        %776 = vmatprep.subr.mxu0 0.0
        %777 = vmatpush1.msra.mxu0 0.0
        %778 = vmatprep.subr.mxu0 0.0
        %779 = vmatpush1.msra.mxu0 0.0
        %780 = vmatprep.mubr.f32.mxu0 0.0
        %781 = vmatmul.mubr.f32.gmra.mrb[0].mxu0 %v578
        %v782 = vpop.f32.mrb[0].mxu0
        %v783 = vadd.f32 %v557, %v782
        %v784 = vpop.f32.mrb[0].mxu0
        %v785 = vadd.f32 %v557, %v784
        %786 = vmatprep.mubr.f32.mxu0 0.0
        %787 = vmatmul.mubr.f32.gmra.mrb[0].mxu0 %v581
        %v788 = vpop.f32.mrb[0].mxu0
        %v789 = vadd.f32 %v562, %v788
        %v790 = vpop.f32.mrb[0].mxu0
        %v791 = vadd.f32 %v562, %v790
        %792 = vmatprep.mubr.f32.mxu0 0.0
        %793 = vmatmul.mubr.f32.gmra.mrb[0].mxu0 %v584
        %v794 = vpop.f32.mrb[0].mxu0
        %v795 = vadd.f32 %v567, %v794
        %v796 = vpop.f32.mrb[0].mxu0
        %v797 = vadd.f32 %v567, %v796
        %798 = vmatprep.mubr.f32.mxu0 0.0
        %799 = vmatmul.mubr.f32.gmra.mrb[0].mxu0 %v587
        %v800 = vpop.f32.mrb[0].mxu0
        %v801 = vadd.f32 %v572, %v800
        %v802 = vpop.f32.mrb[0].mxu0
        %v803 = vadd.f32 %v572, %v802
        %804 = vdwg.mxu0
        %v805 = vmax.f32 %v783, 0.0
        %v806 = vmax.f32 %v785, 0.0
        %v807 = vmax.f32 %v789, 0.0
        %v808 = vmax.f32 %v791, 0.0
        %v809 = vmax.f32 %v795, 0.0
        %v810 = vmax.f32 %v797, 0.0
        %v811 = vmax.f32 %v801, 0.0
        %v812 = vmax.f32 %v803, 0.0
        %v813 = vadd.f32 %v805, %v806
        %814 = vadd.xlane.f32.xlu0 %v813
        %v815 = vpop.xlane.xlu0 %814
        %v816 = vadd.f32 %v807, %v808
        %817 = vadd.xlane.f32.xlu0 %v816
        %v818 = vpop.xlane.xlu0 %817
        %v819 = vadd.f32 %v809, %v810
        %820 = vadd.xlane.f32.xlu0 %v819
        %v821 = vpop.xlane.xlu0 %820
        %v822 = vadd.f32 %v811, %v812
        %823 = vadd.xlane.f32.xlu0 %v822
        %v824 = vpop.xlane.xlu0 %823
        %v825 = vmul.f32 %v815, %v703
        %v826 = vmul.f32 %v818, %v703
        %v827 = vmul.f32 %v821, %v703
        %v828 = vmul.f32 %v824, %v703
        %v833 = vlaneseq
        %v834 = vand.u32 %v833, 127
        %v835 = vlaneseq
        %v836 = vshrl.u32 %v835, 7
        %v837 = vsub.s32 %v834, %v836
        %v838 = vrot.slane %v704, %v837
        %v839 = vadd.s32 %v834, 4294967288
        %v840 = vlaneseq
        %v841 = vshrl.u32 %v840, 7
        %v842 = vsub.s32 %v839, %v841
        %v843 = vrot.slane %v705, %v842
        %vm844 = vcmask 130112
        %v845 = vsel %vm844, %v843, %v838
        %v846 = vadd.s32 %v834, 4294967280
        %v847 = vlaneseq
        %v848 = vshrl.u32 %v847, 7
        %v849 = vsub.s32 %v846, %v848
        %v850 = vrot.slane %v706, %v849
        %vm851 = vcmask 195712
        %v852 = vsel %vm851, %v850, %v845
        %v853 = vadd.s32 %v834, 4294967272
        %v854 = vlaneseq
        %v855 = vshrl.u32 %v854, 7
        %v856 = vsub.s32 %v853, %v855
        %v857 = vrot.slane %v707, %v856
        %vm858 = vcmask 261312
        %v859 = vsel %vm858, %v857, %v852
        %v865 = vlaneseq
        %v866 = vshrl.u32 %v865, 7
        %v867 = vsub.s32 %v834, %v866
        %v868 = vrot.slane %v825, %v867
        %v869 = vlaneseq
        %v870 = vshrl.u32 %v869, 7
        %v871 = vsub.s32 %v839, %v870
        %v872 = vrot.slane %v826, %v871
        %v873 = vsel %vm844, %v872, %v868
        %v874 = vlaneseq
        %v875 = vshrl.u32 %v874, 7
        %v876 = vsub.s32 %v846, %v875
        %v877 = vrot.slane %v827, %v876
        %v878 = vsel %vm851, %v877, %v873
        %v879 = vlaneseq
        %v880 = vshrl.u32 %v879, 7
        %v881 = vsub.s32 %v853, %v880
        %v882 = vrot.slane %v828, %v881
        %v883 = vsel %vm858, %v882, %v878
        %vm885 = vcmask 1040384
        %v886 = vsel %vm885, %v859, %v883
        %vm887 = vcmask 254976
        %888 = vst.msk [vmem:[%s503] sm:$0x3] %vm887, %v886
        %v889 = vld [vmem:[%s514] sm:$0x3]
        %v890 = vld [vmem:[%s519] sm:$0xff]
        %v891 = vld [vmem:[%s519 + $0x8] sm:$0xff]
        %v892 = vld [vmem:[%s519 + $0x10] sm:$0xff]
        %v893 = vld [vmem:[%s519 + $0x18] sm:$0xff]
        %v894 = vld [vmem:[%s524] sm:$0xff]
        %v895 = vld [vmem:[%s524 + $0x8] sm:$0xff]
        %v896 = vld [vmem:[%s524 + $0x10] sm:$0xff]
        %v897 = vld [vmem:[%s524 + $0x18] sm:$0xff]
        %v898 = vld [vmem:[%s524 + $0x20] sm:$0xff]
        %v899 = vld [vmem:[%s524 + $0x28] sm:$0xff]
        %v900 = vld [vmem:[%s524 + $0x30] sm:$0xff]
        %v901 = vld [vmem:[%s524 + $0x38] sm:$0xff]
        %v902 = vld [vmem:[%s524 + $0x40] sm:$0xff]
        %v903 = vld [vmem:[%s524 + $0x48] sm:$0xff]
        %v904 = vld [vmem:[%s524 + $0x50] sm:$0xff]
        %v905 = vld [vmem:[%s524 + $0x58] sm:$0xff]
        %v906 = vld [vmem:[%s524 + $0x60] sm:$0xff]
        %v907 = vld [vmem:[%s524 + $0x68] sm:$0xff]
        %v908 = vld [vmem:[%s524 + $0x70] sm:$0xff]
        %v909 = vld [vmem:[%s524 + $0x78] sm:$0xff]
        %v910 = vld [vmem:[%s524 + $0x80] sm:$0xff]
        %v911 = vld [vmem:[%s524 + $0x88] sm:$0xff]
        %v912 = vld [vmem:[%s524 + $0x90] sm:$0xff]
        %v913 = vld [vmem:[%s524 + $0x98] sm:$0xff]
        %v914 = vld [vmem:[%s524 + $0xa0] sm:$0xff]
        %v915 = vld [vmem:[%s524 + $0xa8] sm:$0xff]
        %v916 = vld [vmem:[%s524 + $0xb0] sm:$0xff]
        %v917 = vld [vmem:[%s524 + $0xb8] sm:$0xff]
        %v918 = vld [vmem:[%s524 + $0xc0] sm:$0xff]
        %v919 = vld [vmem:[%s524 + $0xc8] sm:$0xff]
        %v920 = vld [vmem:[%s524 + $0xd0] sm:$0xff]
        %v921 = vld [vmem:[%s524 + $0xd8] sm:$0xff]
        %v922 = vld [vmem:[%s524 + $0xe0] sm:$0xff]
        %v923 = vld [vmem:[%s524 + $0xe8] sm:$0xff]
        %v924 = vld [vmem:[%s524 + $0xf0] sm:$0xff]
        %v925 = vld [vmem:[%s524 + $0xf8] sm:$0xff]
        %v926 = vld [vmem:[%s527] sm:$0x1]
        %v927 = vld [vmem:[%s532] sm:$0xff]
        %v928 = vld [vmem:[%s532 + $0x8] sm:$0xff]
        %v929 = vld [vmem:[%s532 + $0x10] sm:$0xff]
        %v930 = vld [vmem:[%s532 + $0x18] sm:$0xff]
        %v931 = vld [vmem:[%s535] sm:$0x1]
        %v932 = vld [vmem:[%s540] sm:$0xff]
        %v933 = vld [vmem:[%s540 + $0x8] sm:$0xff]
        %v934 = vld [vmem:[%s540 + $0x10] sm:$0xff]
        %v935 = vld [vmem:[%s540 + $0x18] sm:$0xff]
        %v936 = vld [vmem:[%s540 + $0x20] sm:$0xff]
        %v937 = vld [vmem:[%s540 + $0x28] sm:$0xff]
        %v938 = vld [vmem:[%s540 + $0x30] sm:$0xff]
        %v939 = vld [vmem:[%s540 + $0x38] sm:$0xff]
        %v940 = vld [vmem:[%s544] sm:$0x3]
        %v942 = vlaneseq
        %v943 = vshrl.u32 %v942, 7
        %v944 = vsub.s32 0, %v943
        %v945 = vrot.slane %v926, %v944
        %vm947 = vcmask 261120
        %v949 = vsel %vm947, %v886, 0
        %951 = vmatprep.subr.mxu0 0.0
        %952 = vmatpush1.msra.mxu0 %v890
        %953 = vmatprep.subr.mxu0 0.0
        %954 = vmatpush1.msra.mxu0 %v891
        %955 = vmatprep.subr.mxu0 0.0
        %956 = vmatpush1.msra.mxu0 %v892
        %957 = vmatprep.subr.mxu0 0.0
        %958 = vmatpush1.msra.mxu0 %v893
        %959 = vmatprep.subr.mxu0 0.0
        %960 = vmatpush1.msra.mxu0 0.0
        %961 = vmatprep.subr.mxu0 0.0
        %962 = vmatpush1.msra.mxu0 0.0
        %963 = vmatprep.subr.mxu0 0.0
        %964 = vmatpush1.msra.mxu0 0.0
        %965 = vmatprep.subr.mxu0 0.0
        %966 = vmatpush1.msra.mxu0 0.0
        %967 = vmatprep.subr.mxu0 0.0
        %968 = vmatpush1.msra.mxu0 0.0
        %969 = vmatprep.subr.mxu0 0.0
        %970 = vmatpush1.msra.mxu0 0.0
        %971 = vmatprep.subr.mxu0 0.0
        %972 = vmatpush1.msra.mxu0 0.0
        %973 = vmatprep.subr.mxu0 0.0
        %974 = vmatpush1.msra.mxu0 0.0
        %975 = vmatprep.subr.mxu0 0.0
        %976 = vmatpush1.msra.mxu0 0.0
        %977 = vmatprep.subr.mxu0 0.0
        %978 = vmatpush1.msra.mxu0 0.0
        %979 = vmatprep.subr.mxu0 0.0
        %980 = vmatpush1.msra.mxu0 0.0
        %981 = vmatprep.subr.mxu0 0.0
        %982 = vmatpush1.msra.mxu0 0.0
        %983 = vmatprep.subr.mxu0 0.0
        %984 = vmatpush1.msra.mxu0 0.0
        %985 = vmatprep.subr.mxu0 0.0
        %986 = vmatpush1.msra.mxu0 0.0
        %987 = vmatprep.subr.mxu0 0.0
        %988 = vmatpush1.msra.mxu0 0.0
        %989 = vmatprep.subr.mxu0 0.0
        %990 = vmatpush1.msra.mxu0 0.0
        %991 = vmatprep.subr.mxu0 0.0
        %992 = vmatpush1.msra.mxu0 0.0
        %993 = vmatprep.subr.mxu0 0.0
        %994 = vmatpush1.msra.mxu0 0.0
        %995 = vmatprep.subr.mxu0 0.0
        %996 = vmatpush1.msra.mxu0 0.0
        %997 = vmatprep.subr.mxu0 0.0
        %998 = vmatpush1.msra.mxu0 0.0
        %999 = vmatprep.subr.mxu0 0.0
        %1000 = vmatpush1.msra.mxu0 0.0
        %1001 = vmatprep.subr.mxu0 0.0
        %1002 = vmatpush1.msra.mxu0 0.0
        %1003 = vmatprep.subr.mxu0 0.0
        %1004 = vmatpush1.msra.mxu0 0.0
        %1005 = vmatprep.subr.mxu0 0.0
        %1006 = vmatpush1.msra.mxu0 0.0
        %1007 = vmatprep.subr.mxu0 0.0
        %1008 = vmatpush1.msra.mxu0 0.0
        %1009 = vmatprep.subr.mxu0 0.0
        %1010 = vmatpush1.msra.mxu0 0.0
        %1011 = vmatprep.subr.mxu0 0.0
        %1012 = vmatpush1.msra.mxu0 0.0
        %1013 = vmatprep.subr.mxu0 0.0
        %1014 = vmatpush1.msra.mxu0 0.0
        %1015 = vmatprep.mubr.f32.mxu0 0.0
        %1016 = vmatmul.mubr.f32.gmra.mrb[0].mxu0 %v949
        %v1017 = vpop.f32.mrb[0].mxu0
        %v1018 = vadd.f32 %v945, %v1017
        %v1019 = vpop.f32.mrb[0].mxu0
        %1020 = vdwg.mxu0
        %v1022 = vlaneseq
        %v1023 = vshrl.u32 %v1022, 7
        %v1024 = vsub.s32 0, %v1023
        %v1025 = vrot.slane %v889, %v1024
        %v1026 = vlaneseq
        %v1027 = vshrl.u32 %v1026, 7
        %v1028 = vsub.s32 1, %v1027
        %v1029 = vrot.slane %v889, %v1028
        %1032 = vmatprep.subr.mxu0 0.0
        %1033 = vmatpush1.msra.mxu0 %v894
        %1034 = vmatprep.subr.mxu0 0.0
        %1035 = vmatpush1.msra.mxu0 %v895
        %1036 = vmatprep.subr.mxu0 0.0
        %1037 = vmatpush1.msra.mxu0 %v896
        %1038 = vmatprep.subr.mxu0 0.0
        %1039 = vmatpush1.msra.mxu0 %v897
        %1040 = vmatprep.subr.mxu0 0.0
        %1041 = vmatpush1.msra.mxu0 %v898
        %1042 = vmatprep.subr.mxu0 0.0
        %1043 = vmatpush1.msra.mxu0 %v899
        %1044 = vmatprep.subr.mxu0 0.0
        %1045 = vmatpush1.msra.mxu0 %v900
        %1046 = vmatprep.subr.mxu0 0.0
        %1047 = vmatpush1.msra.mxu0 %v901
        %1048 = vmatprep.subr.mxu0 0.0
        %1049 = vmatpush1.msra.mxu0 %v902
        %1050 = vmatprep.subr.mxu0 0.0
        %1051 = vmatpush1.msra.mxu0 %v903
        %1052 = vmatprep.subr.mxu0 0.0
        %1053 = vmatpush1.msra.mxu0 %v904
        %1054 = vmatprep.subr.mxu0 0.0
        %1055 = vmatpush1.msra.mxu0 %v905
        %1056 = vmatprep.subr.mxu0 0.0
        %1057 = vmatpush1.msra.mxu0 %v906
        %1058 = vmatprep.subr.mxu0 0.0
        %1059 = vmatpush1.msra.mxu0 %v907
        %1060 = vmatprep.subr.mxu0 0.0
        %1061 = vmatpush1.msra.mxu0 %v908
        %1062 = vmatprep.subr.mxu0 0.0
        %1063 = vmatpush1.msra.mxu0 %v909
        %1064 = vmatprep.subr.mxu0 0.0
        %1065 = vmatpush1.msra.mxu0 %v910
        %1066 = vmatprep.subr.mxu0 0.0
        %1067 = vmatpush1.msra.mxu0 %v911
        %1068 = vmatprep.subr.mxu0 0.0
        %1069 = vmatpush1.msra.mxu0 %v912
        %1070 = vmatprep.subr.mxu0 0.0
        %1071 = vmatpush1.msra.mxu0 %v913
        %1072 = vmatprep.subr.mxu0 0.0
        %1073 = vmatpush1.msra.mxu0 %v914
        %1074 = vmatprep.subr.mxu0 0.0
        %1075 = vmatpush1.msra.mxu0 %v915
        %1076 = vmatprep.subr.mxu0 0.0
        %1077 = vmatpush1.msra.mxu0 %v916
        %1078 = vmatprep.subr.mxu0 0.0
        %1079 = vmatpush1.msra.mxu0 %v917
        %1080 = vmatprep.subr.mxu0 0.0
        %1081 = vmatpush1.msra.mxu0 %v918
        %1082 = vmatprep.subr.mxu0 0.0
        %1083 = vmatpush1.msra.mxu0 %v919
        %1084 = vmatprep.subr.mxu0 0.0
        %1085 = vmatpush1.msra.mxu0 %v920
        %1086 = vmatprep.subr.mxu0 0.0
        %1087 = vmatpush1.msra.mxu0 %v921
        %1088 = vmatprep.subr.mxu0 0.0
        %1089 = vmatpush1.msra.mxu0 %v922
        %1090 = vmatprep.subr.mxu0 0.0
        %1091 = vmatpush1.msra.mxu0 %v923
        %1092 = vmatprep.subr.mxu0 0.0
        %1093 = vmatpush1.msra.mxu0 %v924
        %1094 = vmatprep.subr.mxu0 0.0
        %1095 = vmatpush1.msra.mxu0 %v925
        %1096 = vmatprep.mubr.f32.mxu0 %v1029
        %1097 = vmatmul.mubr.f32.gmra.mrb[0].mxu0 %v1025
        %v1098 = vpop.f32.mrb[0].mxu0
        %v1099 = vadd.f32 0.0, %v1098
        %v1100 = vpop.f32.mrb[0].mxu0
        %1101 = vdwg.mxu0
        %v1102 = vadd.f32 %v1018, %v1099
        %v1103 = vmax.f32 %v1102, 0.0
        %v1105 = vlaneseq
        %v1106 = vshrl.u32 %v1105, 7
        %v1107 = vsub.s32 0, %v1106
        %v1108 = vrot.slane %v931, %v1107
        %v1111 = vsel %vm947, %v1103, 0
        %1113 = vmatprep.subr.mxu0 0.0
        %1114 = vmatpush1.msra.mxu0 %v927
        %1115 = vmatprep.subr.mxu0 0.0
        %1116 = vmatpush1.msra.mxu0 %v928
        %1117 = vmatprep.subr.mxu0 0.0
        %1118 = vmatpush1.msra.mxu0 %v929
        %1119 = vmatprep.subr.mxu0 0.0
        %1120 = vmatpush1.msra.mxu0 %v930
        %1121 = vmatprep.subr.mxu0 0.0
        %1122 = vmatpush1.msra.mxu0 0.0
        %1123 = vmatprep.subr.mxu0 0.0
        %1124 = vmatpush1.msra.mxu0 0.0
        %1125 = vmatprep.subr.mxu0 0.0
        %1126 = vmatpush1.msra.mxu0 0.0
        %1127 = vmatprep.subr.mxu0 0.0
        %1128 = vmatpush1.msra.mxu0 0.0
        %1129 = vmatprep.subr.mxu0 0.0
        %1130 = vmatpush1.msra.mxu0 0.0
        %1131 = vmatprep.subr.mxu0 0.0
        %1132 = vmatpush1.msra.mxu0 0.0
        %1133 = vmatprep.subr.mxu0 0.0
        %1134 = vmatpush1.msra.mxu0 0.0
        %1135 = vmatprep.subr.mxu0 0.0
        %1136 = vmatpush1.msra.mxu0 0.0
        %1137 = vmatprep.subr.mxu0 0.0
        %1138 = vmatpush1.msra.mxu0 0.0
        %1139 = vmatprep.subr.mxu0 0.0
        %1140 = vmatpush1.msra.mxu0 0.0
        %1141 = vmatprep.subr.mxu0 0.0
        %1142 = vmatpush1.msra.mxu0 0.0
        %1143 = vmatprep.subr.mxu0 0.0
        %1144 = vmatpush1.msra.mxu0 0.0
        %1145 = vmatprep.subr.mxu0 0.0
        %1146 = vmatpush1.msra.mxu0 0.0
        %1147 = vmatprep.subr.mxu0 0.0
        %1148 = vmatpush1.msra.mxu0 0.0
        %1149 = vmatprep.subr.mxu0 0.0
        %1150 = vmatpush1.msra.mxu0 0.0
        %1151 = vmatprep.subr.mxu0 0.0
        %1152 = vmatpush1.msra.mxu0 0.0
        %1153 = vmatprep.subr.mxu0 0.0
        %1154 = vmatpush1.msra.mxu0 0.0
        %1155 = vmatprep.subr.mxu0 0.0
        %1156 = vmatpush1.msra.mxu0 0.0
        %1157 = vmatprep.subr.mxu0 0.0
        %1158 = vmatpush1.msra.mxu0 0.0
        %1159 = vmatprep.subr.mxu0 0.0
        %1160 = vmatpush1.msra.mxu0 0.0
        %1161 = vmatprep.subr.mxu0 0.0
        %1162 = vmatpush1.msra.mxu0 0.0
        %1163 = vmatprep.subr.mxu0 0.0
        %1164 = vmatpush1.msra.mxu0 0.0
        %1165 = vmatprep.subr.mxu0 0.0
        %1166 = vmatpush1.msra.mxu0 0.0
        %1167 = vmatprep.subr.mxu0 0.0
        %1168 = vmatpush1.msra.mxu0 0.0
        %1169 = vmatprep.subr.mxu0 0.0
        %1170 = vmatpush1.msra.mxu0 0.0
        %1171 = vmatprep.subr.mxu0 0.0
        %1172 = vmatpush1.msra.mxu0 0.0
        %1173 = vmatprep.subr.mxu0 0.0
        %1174 = vmatpush1.msra.mxu0 0.0
        %1175 = vmatprep.subr.mxu0 0.0
        %1176 = vmatpush1.msra.mxu0 0.0
        %1177 = vmatprep.mubr.f32.mxu0 0.0
        %1178 = vmatmul.mubr.f32.gmra.mrb[0].mxu0 %v1111
        %v1179 = vpop.f32.mrb[0].mxu0
        %v1180 = vadd.f32 %v1108, %v1179
        %v1181 = vpop.f32.mrb[0].mxu0
        %1182 = vdwg.mxu0
        %v1183 = vmax.f32 %v1180, 0.0
        %v1185 = vsel %vm947, %v1183, 0
        %1187 = vmatprep.subr.mxu0 %v933
        %1188 = vmatpush1.msra.mxu0 %v932
        %1189 = vmatprep.subr.mxu0 %v935
        %1190 = vmatpush1.msra.mxu0 %v934
        %1191 = vmatprep.subr.mxu0 %v937
        %1192 = vmatpush1.msra.mxu0 %v936
        %1193 = vmatprep.subr.mxu0 %v939
        %1194 = vmatpush1.msra.mxu0 %v938
        %1195 = vmatprep.subr.mxu0 0.0
        %1196 = vmatpush1.msra.mxu0 0.0
        %1197 = vmatprep.subr.mxu0 0.0
        %1198 = vmatpush1.msra.mxu0 0.0
        %1199 = vmatprep.subr.mxu0 0.0
        %1200 = vmatpush1.msra.mxu0 0.0
        %1201 = vmatprep.subr.mxu0 0.0
        %1202 = vmatpush1.msra.mxu0 0.0
        %1203 = vmatprep.subr.mxu0 0.0
        %1204 = vmatpush1.msra.mxu0 0.0
        %1205 = vmatprep.subr.mxu0 0.0
        %1206 = vmatpush1.msra.mxu0 0.0
        %1207 = vmatprep.subr.mxu0 0.0
        %1208 = vmatpush1.msra.mxu0 0.0
        %1209 = vmatprep.subr.mxu0 0.0
        %1210 = vmatpush1.msra.mxu0 0.0
        %1211 = vmatprep.subr.mxu0 0.0
        %1212 = vmatpush1.msra.mxu0 0.0
        %1213 = vmatprep.subr.mxu0 0.0
        %1214 = vmatpush1.msra.mxu0 0.0
        %1215 = vmatprep.subr.mxu0 0.0
        %1216 = vmatpush1.msra.mxu0 0.0
        %1217 = vmatprep.subr.mxu0 0.0
        %1218 = vmatpush1.msra.mxu0 0.0
        %1219 = vmatprep.subr.mxu0 0.0
        %1220 = vmatpush1.msra.mxu0 0.0
        %1221 = vmatprep.subr.mxu0 0.0
        %1222 = vmatpush1.msra.mxu0 0.0
        %1223 = vmatprep.subr.mxu0 0.0
        %1224 = vmatpush1.msra.mxu0 0.0
        %1225 = vmatprep.subr.mxu0 0.0
        %1226 = vmatpush1.msra.mxu0 0.0
        %1227 = vmatprep.subr.mxu0 0.0
        %1228 = vmatpush1.msra.mxu0 0.0
        %1229 = vmatprep.subr.mxu0 0.0
        %1230 = vmatpush1.msra.mxu0 0.0
        %1231 = vmatprep.subr.mxu0 0.0
        %1232 = vmatpush1.msra.mxu0 0.0
        %1233 = vmatprep.subr.mxu0 0.0
        %1234 = vmatpush1.msra.mxu0 0.0
        %1235 = vmatprep.subr.mxu0 0.0
        %1236 = vmatpush1.msra.mxu0 0.0
        %1237 = vmatprep.subr.mxu0 0.0
        %1238 = vmatpush1.msra.mxu0 0.0
        %1239 = vmatprep.subr.mxu0 0.0
        %1240 = vmatpush1.msra.mxu0 0.0
        %1241 = vmatprep.subr.mxu0 0.0
        %1242 = vmatpush1.msra.mxu0 0.0
        %1243 = vmatprep.subr.mxu0 0.0
        %1244 = vmatpush1.msra.mxu0 0.0
        %1245 = vmatprep.subr.mxu0 0.0
        %1246 = vmatpush1.msra.mxu0 0.0
        %1247 = vmatprep.subr.mxu0 0.0
        %1248 = vmatpush1.msra.mxu0 0.0
        %1249 = vmatprep.subr.mxu0 0.0
        %1250 = vmatpush1.msra.mxu0 0.0
        %1251 = vmatprep.mubr.f32.mxu0 0.0
        %1252 = vmatmul.mubr.f32.gmra.mrb[0].mxu0 %v1185
        %v1253 = vpop.f32.mrb[0].mxu0
        %v1254 = vadd.f32 0.0, %v1253
        %v1255 = vpop.f32.mrb[0].mxu0
        %v1256 = vadd.f32 0.0, %v1255
        %1257 = vdwg.mxu0
        %v1258 = vadd.f32 %v1025, %v1254
        %v1259 = vadd.f32 %v1029, %v1256
        %v1261 = vlaneseq
        %v1262 = vshrl.u32 %v1261, 7
        %v1263 = vsub.s32 0, %v1262
        %v1264 = vrot.slane %v940, %v1263
        %v1265 = vlaneseq
        %v1266 = vshrl.u32 %v1265, 7
        %v1267 = vsub.s32 1, %v1266
        %v1268 = vrot.slane %v940, %v1267
        %v1271 = vadd.f32 %v1258, %v1264
        %v1272 = vadd.f32 %v1259, %v1268
        %v1275 = vcombine.low %v1271, %v1272
        %v1277 = vunpack.c.l.s4 1983009808
        %v1278 = vunpack.c.0.s8 %v1277
        %v1279 = vlaneseq
        %v1280 = vshrl.u32 %v1279, 7
        %v1281 = vsub.s32 %v1278, %v1280
        %v1282 = vrot.slane %v1275, %v1281
        %1284 = vst [vmem:[%s510] sm:$0xf] %v1282
        %1285 = vmatprep.subr.mxu0 0.0
        %1286 = vmatpush1.msra.mxu0 %v894
        %1287 = vmatprep.subr.mxu0 0.0
        %1288 = vmatpush1.msra.mxu0 %v895
        %1289 = vmatprep.subr.mxu0 0.0
        %1290 = vmatpush1.msra.mxu0 %v896
        %1291 = vmatprep.subr.mxu0 0.0
        %1292 = vmatpush1.msra.mxu0 %v897
        %1293 = vmatprep.subr.mxu0 0.0
        %1294 = vmatpush1.msra.mxu0 %v898
        %1295 = vmatprep.subr.mxu0 0.0
        %1296 = vmatpush1.msra.mxu0 %v899
        %1297 = vmatprep.subr.mxu0 0.0
        %1298 = vmatpush1.msra.mxu0 %v900
        %1299 = vmatprep.subr.mxu0 0.0
        %1300 = vmatpush1.msra.mxu0 %v901
        %1301 = vmatprep.subr.mxu0 0.0
        %1302 = vmatpush1.msra.mxu0 %v902
        %1303 = vmatprep.subr.mxu0 0.0
        %1304 = vmatpush1.msra.mxu0 %v903
        %1305 = vmatprep.subr.mxu0 0.0
        %1306 = vmatpush1.msra.mxu0 %v904
        %1307 = vmatprep.subr.mxu0 0.0
        %1308 = vmatpush1.msra.mxu0 %v905
        %1309 = vmatprep.subr.mxu0 0.0
        %1310 = vmatpush1.msra.mxu0 %v906
        %1311 = vmatprep.subr.mxu0 0.0
        %1312 = vmatpush1.msra.mxu0 %v907
        %1313 = vmatprep.subr.mxu0 0.0
        %1314 = vmatpush1.msra.mxu0 %v908
        %1315 = vmatprep.subr.mxu0 0.0
        %1316 = vmatpush1.msra.mxu0 %v909
        %1317 = vmatprep.subr.mxu0 0.0
        %1318 = vmatpush1.msra.mxu0 %v910
        %1319 = vmatprep.subr.mxu0 0.0
        %1320 = vmatpush1.msra.mxu0 %v911
        %1321 = vmatprep.subr.mxu0 0.0
        %1322 = vmatpush1.msra.mxu0 %v912
        %1323 = vmatprep.subr.mxu0 0.0
        %1324 = vmatpush1.msra.mxu0 %v913
        %1325 = vmatprep.subr.mxu0 0.0
        %1326 = vmatpush1.msra.mxu0 %v914
        %1327 = vmatprep.subr.mxu0 0.0
        %1328 = vmatpush1.msra.mxu0 %v915
        %1329 = vmatprep.subr.mxu0 0.0
        %1330 = vmatpush1.msra.mxu0 %v916
        %1331 = vmatprep.subr.mxu0 0.0
        %1332 = vmatpush1.msra.mxu0 %v917
        %1333 = vmatprep.subr.mxu0 0.0
        %1334 = vmatpush1.msra.mxu0 %v918
        %1335 = vmatprep.subr.mxu0 0.0
        %1336 = vmatpush1.msra.mxu0 %v919
        %1337 = vmatprep.subr.mxu0 0.0
        %1338 = vmatpush1.msra.mxu0 %v920
        %1339 = vmatprep.subr.mxu0 0.0
        %1340 = vmatpush1.msra.mxu0 %v921
        %1341 = vmatprep.subr.mxu0 0.0
        %1342 = vmatpush1.msra.mxu0 %v922
        %1343 = vmatprep.subr.mxu0 0.0
        %1344 = vmatpush1.msra.mxu0 %v923
        %1345 = vmatprep.subr.mxu0 0.0
        %1346 = vmatpush1.msra.mxu0 %v924
        %1347 = vmatprep.subr.mxu0 0.0
        %1348 = vmatpush1.msra.mxu0 %v925
        %1349 = vmatprep.mubr.f32.mxu0 %v1272
        %1350 = vmatmul.mubr.f32.gmra.mrb[0].mxu0 %v1271
        %v1351 = vpop.f32.mrb[0].mxu0
        %v1352 = vadd.f32 0.0, %v1351
        %v1353 = vpop.f32.mrb[0].mxu0
        %1354 = vdwg.mxu0
        %v1355 = vadd.f32 %v1018, %v1352
        %v1356 = vmax.f32 %v1355, 0.0
        %v1358 = vsel %vm947, %v1356, 0
        %1360 = vmatprep.subr.mxu0 0.0
        %1361 = vmatpush1.msra.mxu0 %v927
        %1362 = vmatprep.subr.mxu0 0.0
        %1363 = vmatpush1.msra.mxu0 %v928
        %1364 = vmatprep.subr.mxu0 0.0
        %1365 = vmatpush1.msra.mxu0 %v929
        %1366 = vmatprep.subr.mxu0 0.0
        %1367 = vmatpush1.msra.mxu0 %v930
        %1368 = vmatprep.subr.mxu0 0.0
        %1369 = vmatpush1.msra.mxu0 0.0
        %1370 = vmatprep.subr.mxu0 0.0
        %1371 = vmatpush1.msra.mxu0 0.0
        %1372 = vmatprep.subr.mxu0 0.0
        %1373 = vmatpush1.msra.mxu0 0.0
        %1374 = vmatprep.subr.mxu0 0.0
        %1375 = vmatpush1.msra.mxu0 0.0
        %1376 = vmatprep.subr.mxu0 0.0
        %1377 = vmatpush1.msra.mxu0 0.0
        %1378 = vmatprep.subr.mxu0 0.0
        %1379 = vmatpush1.msra.mxu0 0.0
        %1380 = vmatprep.subr.mxu0 0.0
        %1381 = vmatpush1.msra.mxu0 0.0
        %1382 = vmatprep.subr.mxu0 0.0
        %1383 = vmatpush1.msra.mxu0 0.0
        %1384 = vmatprep.subr.mxu0 0.0
        %1385 = vmatpush1.msra.mxu0 0.0
        %1386 = vmatprep.subr.mxu0 0.0
        %1387 = vmatpush1.msra.mxu0 0.0
        %1388 = vmatprep.subr.mxu0 0.0
        %1389 = vmatpush1.msra.mxu0 0.0
        %1390 = vmatprep.subr.mxu0 0.0
        %1391 = vmatpush1.msra.mxu0 0.0
        %1392 = vmatprep.subr.mxu0 0.0
        %1393 = vmatpush1.msra.mxu0 0.0
        %1394 = vmatprep.subr.mxu0 0.0
        %1395 = vmatpush1.msra.mxu0 0.0
        %1396 = vmatprep.subr.mxu0 0.0
        %1397 = vmatpush1.msra.mxu0 0.0
        %1398 = vmatprep.subr.mxu0 0.0
        %1399 = vmatpush1.msra.mxu0 0.0
        %1400 = vmatprep.subr.mxu0 0.0
        %1401 = vmatpush1.msra.mxu0 0.0
        %1402 = vmatprep.subr.mxu0 0.0
        %1403 = vmatpush1.msra.mxu0 0.0
        %1404 = vmatprep.subr.mxu0 0.0
        %1405 = vmatpush1.msra.mxu0 0.0
        %1406 = vmatprep.subr.mxu0 0.0
        %1407 = vmatpush1.msra.mxu0 0.0
        %1408 = vmatprep.subr.mxu0 0.0
        %1409 = vmatpush1.msra.mxu0 0.0
        %1410 = vmatprep.subr.mxu0 0.0
        %1411 = vmatpush1.msra.mxu0 0.0
        %1412 = vmatprep.subr.mxu0 0.0
        %1413 = vmatpush1.msra.mxu0 0.0
        %1414 = vmatprep.subr.mxu0 0.0
        %1415 = vmatpush1.msra.mxu0 0.0
        %1416 = vmatprep.subr.mxu0 0.0
        %1417 = vmatpush1.msra.mxu0 0.0
        %1418 = vmatprep.subr.mxu0 0.0
        %1419 = vmatpush1.msra.mxu0 0.0
        %1420 = vmatprep.subr.mxu0 0.0
        %1421 = vmatpush1.msra.mxu0 0.0
        %1422 = vmatprep.subr.mxu0 0.0
        %1423 = vmatpush1.msra.mxu0 0.0
        %1424 = vmatprep.mubr.f32.mxu0 0.0
        %1425 = vmatmul.mubr.f32.gmra.mrb[0].mxu0 %v1358
        %v1426 = vpop.f32.mrb[0].mxu0
        %v1427 = vadd.f32 %v1108, %v1426
        %v1428 = vpop.f32.mrb[0].mxu0
        %1429 = vdwg.mxu0
        %v1430 = vmax.f32 %v1427, 0.0
        %v1432 = vsel %vm947, %v1430, 0
        %1434 = vmatprep.subr.mxu0 %v933
        %1435 = vmatpush1.msra.mxu0 %v932
        %1436 = vmatprep.subr.mxu0 %v935
        %1437 = vmatpush1.msra.mxu0 %v934
        %1438 = vmatprep.subr.mxu0 %v937
        %1439 = vmatpush1.msra.mxu0 %v936
        %1440 = vmatprep.subr.mxu0 %v939
        %1441 = vmatpush1.msra.mxu0 %v938
        %1442 = vmatprep.subr.mxu0 0.0
        %1443 = vmatpush1.msra.mxu0 0.0
        %1444 = vmatprep.subr.mxu0 0.0
        %1445 = vmatpush1.msra.mxu0 0.0
        %1446 = vmatprep.subr.mxu0 0.0
        %1447 = vmatpush1.msra.mxu0 0.0
        %1448 = vmatprep.subr.mxu0 0.0
        %1449 = vmatpush1.msra.mxu0 0.0
        %1450 = vmatprep.subr.mxu0 0.0
        %1451 = vmatpush1.msra.mxu0 0.0
        %1452 = vmatprep.subr.mxu0 0.0
        %1453 = vmatpush1.msra.mxu0 0.0
        %1454 = vmatprep.subr.mxu0 0.0
        %1455 = vmatpush1.msra.mxu0 0.0
        %1456 = vmatprep.subr.mxu0 0.0
        %1457 = vmatpush1.msra.mxu0 0.0
        %1458 = vmatprep.subr.mxu0 0.0
        %1459 = vmatpush1.msra.mxu0 0.0
        %1460 = vmatprep.subr.mxu0 0.0
        %1461 = vmatpush1.msra.mxu0 0.0
        %1462 = vmatprep.subr.mxu0 0.0
        %1463 = vmatpush1.msra.mxu0 0.0
        %1464 = vmatprep.subr.mxu0 0.0
        %1465 = vmatpush1.msra.mxu0 0.0
        %1466 = vmatprep.subr.mxu0 0.0
        %1467 = vmatpush1.msra.mxu0 0.0
        %1468 = vmatprep.subr.mxu0 0.0
        %1469 = vmatpush1.msra.mxu0 0.0
        %1470 = vmatprep.subr.mxu0 0.0
        %1471 = vmatpush1.msra.mxu0 0.0
        %1472 = vmatprep.subr.mxu0 0.0
        %1473 = vmatpush1.msra.mxu0 0.0
        %1474 = vmatprep.subr.mxu0 0.0
        %1475 = vmatpush1.msra.mxu0 0.0
        %1476 = vmatprep.subr.mxu0 0.0
        %1477 = vmatpush1.msra.mxu0 0.0
        %1478 = vmatprep.subr.mxu0 0.0
        %1479 = vmatpush1.msra.mxu0 0.0
        %1480 = vmatprep.subr.mxu0 0.0
        %1481 = vmatpush1.msra.mxu0 0.0
        %1482 = vmatprep.subr.mxu0 0.0
        %1483 = vmatpush1.msra.mxu0 0.0
        %1484 = vmatprep.subr.mxu0 0.0
        %1485 = vmatpush1.msra.mxu0 0.0
        %1486 = vmatprep.subr.mxu0 0.0
        %1487 = vmatpush1.msra.mxu0 0.0
        %1488 = vmatprep.subr.mxu0 0.0
        %1489 = vmatpush1.msra.mxu0 0.0
        %1490 = vmatprep.subr.mxu0 0.0
        %1491 = vmatpush1.msra.mxu0 0.0
        %1492 = vmatprep.subr.mxu0 0.0
        %1493 = vmatpush1.msra.mxu0 0.0
        %1494 = vmatprep.subr.mxu0 0.0
        %1495 = vmatpush1.msra.mxu0 0.0
        %1496 = vmatprep.subr.mxu0 0.0
        %1497 = vmatpush1.msra.mxu0 0.0
        %1498 = vmatprep.mubr.f32.mxu0 0.0
        %1499 = vmatmul.mubr.f32.gmra.mrb[0].mxu0 %v1432
        %v1500 = vpop.f32.mrb[0].mxu0
        %v1501 = vadd.f32 0.0, %v1500
        %v1502 = vpop.f32.mrb[0].mxu0
        %v1503 = vadd.f32 0.0, %v1502
        %1504 = vdwg.mxu0
        %v1505 = vadd.f32 %v1271, %v1501
        %v1506 = vadd.f32 %v1272, %v1503
        %v1507 = vadd.f32 %v1505, %v1264
        %v1508 = vadd.f32 %v1506, %v1268
        %v1511 = vcombine.low %v1507, %v1508
        %v1513 = vunpack.c.l.s4 1983009808
        %v1514 = vunpack.c.0.s8 %v1513
        %v1515 = vlaneseq
        %v1516 = vshrl.u32 %v1515, 7
        %v1517 = vsub.s32 %v1514, %v1516
        %v1518 = vrot.slane %v1511, %v1517
        %s1520 = scalar_lea.vmem %s510, 4 [#allocation4]
        %1521 = vst [vmem:[%s1520] sm:$0xf] %v1518
        %1522 = vmatprep.subr.mxu0 0.0
        %1523 = vmatpush1.msra.mxu0 %v894
        %1524 = vmatprep.subr.mxu0 0.0
        %1525 = vmatpush1.msra.mxu0 %v895
        %1526 = vmatprep.subr.mxu0 0.0
        %1527 = vmatpush1.msra.mxu0 %v896
        %1528 = vmatprep.subr.mxu0 0.0
        %1529 = vmatpush1.msra.mxu0 %v897
        %1530 = vmatprep.subr.mxu0 0.0
        %1531 = vmatpush1.msra.mxu0 %v898
        %1532 = vmatprep.subr.mxu0 0.0
        %1533 = vmatpush1.msra.mxu0 %v899
        %1534 = vmatprep.subr.mxu0 0.0
        %1535 = vmatpush1.msra.mxu0 %v900
        %1536 = vmatprep.subr.mxu0 0.0
        %1537 = vmatpush1.msra.mxu0 %v901
        %1538 = vmatprep.subr.mxu0 0.0
        %1539 = vmatpush1.msra.mxu0 %v902
        %1540 = vmatprep.subr.mxu0 0.0
        %1541 = vmatpush1.msra.mxu0 %v903
        %1542 = vmatprep.subr.mxu0 0.0
        %1543 = vmatpush1.msra.mxu0 %v904
        %1544 = vmatprep.subr.mxu0 0.0
        %1545 = vmatpush1.msra.mxu0 %v905
        %1546 = vmatprep.subr.mxu0 0.0
        %1547 = vmatpush1.msra.mxu0 %v906
        %1548 = vmatprep.subr.mxu0 0.0
        %1549 = vmatpush1.msra.mxu0 %v907
        %1550 = vmatprep.subr.mxu0 0.0
        %1551 = vmatpush1.msra.mxu0 %v908
        %1552 = vmatprep.subr.mxu0 0.0
        %1553 = vmatpush1.msra.mxu0 %v909
        %1554 = vmatprep.subr.mxu0 0.0
        %1555 = vmatpush1.msra.mxu0 %v910
        %1556 = vmatprep.subr.mxu0 0.0
        %1557 = vmatpush1.msra.mxu0 %v911
        %1558 = vmatprep.subr.mxu0 0.0
        %1559 = vmatpush1.msra.mxu0 %v912
        %1560 = vmatprep.subr.mxu0 0.0
        %1561 = vmatpush1.msra.mxu0 %v913
        %1562 = vmatprep.subr.mxu0 0.0
        %1563 = vmatpush1.msra.mxu0 %v914
        %1564 = vmatprep.subr.mxu0 0.0
        %1565 = vmatpush1.msra.mxu0 %v915
        %1566 = vmatprep.subr.mxu0 0.0
        %1567 = vmatpush1.msra.mxu0 %v916
        %1568 = vmatprep.subr.mxu0 0.0
        %1569 = vmatpush1.msra.mxu0 %v917
        %1570 = vmatprep.subr.mxu0 0.0
        %1571 = vmatpush1.msra.mxu0 %v918
        %1572 = vmatprep.subr.mxu0 0.0
        %1573 = vmatpush1.msra.mxu0 %v919
        %1574 = vmatprep.subr.mxu0 0.0
        %1575 = vmatpush1.msra.mxu0 %v920
        %1576 = vmatprep.subr.mxu0 0.0
        %1577 = vmatpush1.msra.mxu0 %v921
        %1578 = vmatprep.subr.mxu0 0.0
        %1579 = vmatpush1.msra.mxu0 %v922
        %1580 = vmatprep.subr.mxu0 0.0
        %1581 = vmatpush1.msra.mxu0 %v923
        %1582 = vmatprep.subr.mxu0 0.0
        %1583 = vmatpush1.msra.mxu0 %v924
        %1584 = vmatprep.subr.mxu0 0.0
        %1585 = vmatpush1.msra.mxu0 %v925
        %1586 = vmatprep.mubr.f32.mxu0 %v1508
        %1587 = vmatmul.mubr.f32.gmra.mrb[0].mxu0 %v1507
        %v1588 = vpop.f32.mrb[0].mxu0
        %v1589 = vadd.f32 0.0, %v1588
        %v1590 = vpop.f32.mrb[0].mxu0
        %1591 = vdwg.mxu0
        %v1592 = vadd.f32 %v1018, %v1589
        %v1593 = vmax.f32 %v1592, 0.0
        %v1595 = vsel %vm947, %v1593, 0
        %1597 = vmatprep.subr.mxu0 0.0
        %1598 = vmatpush1.msra.mxu0 %v927
        %1599 = vmatprep.subr.mxu0 0.0
        %1600 = vmatpush1.msra.mxu0 %v928
        %1601 = vmatprep.subr.mxu0 0.0
        %1602 = vmatpush1.msra.mxu0 %v929
        %1603 = vmatprep.subr.mxu0 0.0
        %1604 = vmatpush1.msra.mxu0 %v930
        %1605 = vmatprep.subr.mxu0 0.0
        %1606 = vmatpush1.msra.mxu0 0.0
        %1607 = vmatprep.subr.mxu0 0.0
        %1608 = vmatpush1.msra.mxu0 0.0
        %1609 = vmatprep.subr.mxu0 0.0
        %1610 = vmatpush1.msra.mxu0 0.0
        %1611 = vmatprep.subr.mxu0 0.0
        %1612 = vmatpush1.msra.mxu0 0.0
        %1613 = vmatprep.subr.mxu0 0.0
        %1614 = vmatpush1.msra.mxu0 0.0
        %1615 = vmatprep.subr.mxu0 0.0
        %1616 = vmatpush1.msra.mxu0 0.0
        %1617 = vmatprep.subr.mxu0 0.0
        %1618 = vmatpush1.msra.mxu0 0.0
        %1619 = vmatprep.subr.mxu0 0.0
        %1620 = vmatpush1.msra.mxu0 0.0
        %1621 = vmatprep.subr.mxu0 0.0
        %1622 = vmatpush1.msra.mxu0 0.0
        %1623 = vmatprep.subr.mxu0 0.0
        %1624 = vmatpush1.msra.mxu0 0.0
        %1625 = vmatprep.subr.mxu0 0.0
        %1626 = vmatpush1.msra.mxu0 0.0
        %1627 = vmatprep.subr.mxu0 0.0
        %1628 = vmatpush1.msra.mxu0 0.0
        %1629 = vmatprep.subr.mxu0 0.0
        %1630 = vmatpush1.msra.mxu0 0.0
        %1631 = vmatprep.subr.mxu0 0.0
        %1632 = vmatpush1.msra.mxu0 0.0
        %1633 = vmatprep.subr.mxu0 0.0
        %1634 = vmatpush1.msra.mxu0 0.0
        %1635 = vmatprep.subr.mxu0 0.0
        %1636 = vmatpush1.msra.mxu0 0.0
        %1637 = vmatprep.subr.mxu0 0.0
        %1638 = vmatpush1.msra.mxu0 0.0
        %1639 = vmatprep.subr.mxu0 0.0
        %1640 = vmatpush1.msra.mxu0 0.0
        %1641 = vmatprep.subr.mxu0 0.0
        %1642 = vmatpush1.msra.mxu0 0.0
        %1643 = vmatprep.subr.mxu0 0.0
        %1644 = vmatpush1.msra.mxu0 0.0
        %1645 = vmatprep.subr.mxu0 0.0
        %1646 = vmatpush1.msra.mxu0 0.0
        %1647 = vmatprep.subr.mxu0 0.0
        %1648 = vmatpush1.msra.mxu0 0.0
        %1649 = vmatprep.subr.mxu0 0.0
        %1650 = vmatpush1.msra.mxu0 0.0
        %1651 = vmatprep.subr.mxu0 0.0
        %1652 = vmatpush1.msra.mxu0 0.0
        %1653 = vmatprep.subr.mxu0 0.0
        %1654 = vmatpush1.msra.mxu0 0.0
        %1655 = vmatprep.subr.mxu0 0.0
        %1656 = vmatpush1.msra.mxu0 0.0
        %1657 = vmatprep.subr.mxu0 0.0
        %1658 = vmatpush1.msra.mxu0 0.0
        %1659 = vmatprep.subr.mxu0 0.0
        %1660 = vmatpush1.msra.mxu0 0.0
        %1661 = vmatprep.mubr.f32.mxu0 0.0
        %1662 = vmatmul.mubr.f32.gmra.mrb[0].mxu0 %v1595
        %v1663 = vpop.f32.mrb[0].mxu0
        %v1664 = vadd.f32 %v1108, %v1663
        %v1665 = vpop.f32.mrb[0].mxu0
        %1666 = vdwg.mxu0
        %v1667 = vmax.f32 %v1664, 0.0
        %v1669 = vsel %vm947, %v1667, 0
        %1671 = vmatprep.subr.mxu0 %v933
        %1672 = vmatpush1.msra.mxu0 %v932
        %1673 = vmatprep.subr.mxu0 %v935
        %1674 = vmatpush1.msra.mxu0 %v934
        %1675 = vmatprep.subr.mxu0 %v937
        %1676 = vmatpush1.msra.mxu0 %v936
        %1677 = vmatprep.subr.mxu0 %v939
        %1678 = vmatpush1.msra.mxu0 %v938
        %1679 = vmatprep.subr.mxu0 0.0
        %1680 = vmatpush1.msra.mxu0 0.0
        %1681 = vmatprep.subr.mxu0 0.0
        %1682 = vmatpush1.msra.mxu0 0.0
        %1683 = vmatprep.subr.mxu0 0.0
        %1684 = vmatpush1.msra.mxu0 0.0
        %1685 = vmatprep.subr.mxu0 0.0
        %1686 = vmatpush1.msra.mxu0 0.0
        %1687 = vmatprep.subr.mxu0 0.0
        %1688 = vmatpush1.msra.mxu0 0.0
        %1689 = vmatprep.subr.mxu0 0.0
        %1690 = vmatpush1.msra.mxu0 0.0
        %1691 = vmatprep.subr.mxu0 0.0
        %1692 = vmatpush1.msra.mxu0 0.0
        %1693 = vmatprep.subr.mxu0 0.0
        %1694 = vmatpush1.msra.mxu0 0.0
        %1695 = vmatprep.subr.mxu0 0.0
        %1696 = vmatpush1.msra.mxu0 0.0
        %1697 = vmatprep.subr.mxu0 0.0
        %1698 = vmatpush1.msra.mxu0 0.0
        %1699 = vmatprep.subr.mxu0 0.0
        %1700 = vmatpush1.msra.mxu0 0.0
        %1701 = vmatprep.subr.mxu0 0.0
        %1702 = vmatpush1.msra.mxu0 0.0
        %1703 = vmatprep.subr.mxu0 0.0
        %1704 = vmatpush1.msra.mxu0 0.0
        %1705 = vmatprep.subr.mxu0 0.0
        %1706 = vmatpush1.msra.mxu0 0.0
        %1707 = vmatprep.subr.mxu0 0.0
        %1708 = vmatpush1.msra.mxu0 0.0
        %1709 = vmatprep.subr.mxu0 0.0
        %1710 = vmatpush1.msra.mxu0 0.0
        %1711 = vmatprep.subr.mxu0 0.0
        %1712 = vmatpush1.msra.mxu0 0.0
        %1713 = vmatprep.subr.mxu0 0.0
        %1714 = vmatpush1.msra.mxu0 0.0
        %1715 = vmatprep.subr.mxu0 0.0
        %1716 = vmatpush1.msra.mxu0 0.0
        %1717 = vmatprep.subr.mxu0 0.0
        %1718 = vmatpush1.msra.mxu0 0.0
        %1719 = vmatprep.subr.mxu0 0.0
        %1720 = vmatpush1.msra.mxu0 0.0
        %1721 = vmatprep.subr.mxu0 0.0
        %1722 = vmatpush1.msra.mxu0 0.0
        %1723 = vmatprep.subr.mxu0 0.0
        %1724 = vmatpush1.msra.mxu0 0.0
        %1725 = vmatprep.subr.mxu0 0.0
        %1726 = vmatpush1.msra.mxu0 0.0
        %1727 = vmatprep.subr.mxu0 0.0
        %1728 = vmatpush1.msra.mxu0 0.0
        %1729 = vmatprep.subr.mxu0 0.0
        %1730 = vmatpush1.msra.mxu0 0.0
        %1731 = vmatprep.subr.mxu0 0.0
        %1732 = vmatpush1.msra.mxu0 0.0
        %1733 = vmatprep.subr.mxu0 0.0
        %1734 = vmatpush1.msra.mxu0 0.0
        %1735 = vmatprep.mubr.f32.mxu0 0.0
        %1736 = vmatmul.mubr.f32.gmra.mrb[0].mxu0 %v1669
        %v1737 = vpop.f32.mrb[0].mxu0
        %v1738 = vadd.f32 0.0, %v1737
        %v1739 = vpop.f32.mrb[0].mxu0
        %v1740 = vadd.f32 0.0, %v1739
        %1741 = vdwg.mxu0
        %v1742 = vadd.f32 %v1507, %v1738
        %v1743 = vadd.f32 %v1508, %v1740
        %v1744 = vadd.f32 %v1742, %v1264
        %v1745 = vadd.f32 %v1743, %v1268
        %v1748 = vcombine.low %v1744, %v1745
        %v1750 = vunpack.c.l.s4 1983009808
        %v1751 = vunpack.c.0.s8 %v1750
        %v1752 = vlaneseq
        %v1753 = vshrl.u32 %v1752, 7
        %v1754 = vsub.s32 %v1751, %v1753
        %v1755 = vrot.slane %v1748, %v1754
        %s1757 = scalar_lea.vmem %s510, 8 [#allocation4]
        %1758 = vst [vmem:[%s1757] sm:$0xf] %v1755
        %s1759 = sand.u32 %s309, 1
        %s1760 = scalar_lea.sflag [#allocation3], %s1759
        %s1761 = sand.u32 %s309, 1
        %s1762 = smul.addr %s1761, 2
        %s1763 = scalar_lea.vmem [#allocation2], %s1762
        %s1764 = sand.u32 %s335, 1
        %s1765 = scalar_lea.sflag [#allocation5], %s1764
        %s1766 = sand.u32 %s335, 1
        %s1767 = smul.addr %s1766, 12
        %s1768 = scalar_lea.vmem [#allocation4], %s1767
        // Predicated region
        $region65: #{tpu_custom_call.1} parent=63 // pred_check
          %p1769 = pneg %p319
        $region66: #{tpu_custom_call.1} parent=63 // pred_check_branch
          %1771 = sbr.rel (%p1769) target = $region68
        $region67: #{tpu_custom_call.1} parent=63 // pred_region
          %s1773 = ssub.s32 32, 32
          %1774 = vsyncadd %s1760, %s1773
          %s1775 = smul.addr %s30, 32
          %s1776 = scalar_lea.hbm %s11, %s1775
          %s1778 = sshll.u32 %s1763, 4
          %s1779 = int_to_ptr.vmem [resolvable:$true] %s1778
          %1781 = dma.vmem_to_hbm [thread:$0]  %s1779, 32, %s1776, %s1760
        $region68: #{tpu_custom_call.1} parent=63 // pred_fallthru
          _
        // Predicated region
        $region69: #{tpu_custom_call.1} parent=63 // pred_check
          %p1782 = pneg %p345
        $region70: #{tpu_custom_call.1} parent=63 // pred_check_branch
          %1784 = sbr.rel (%p1782) target = $region72
        $region71: #{tpu_custom_call.1} parent=63 // pred_region
          %s1786 = ssub.s32 192, 192
          %1787 = vsyncadd %s1765, %s1786
          %s1788 = smul.addr %s30, 6
          %s1789 = smul.addr %s1788, 32
          %s1790 = scalar_lea.hbm %s12, %s1789
          %s1791 = sshll.u32 %s1768, 4
          %s1792 = int_to_ptr.vmem [resolvable:$true] %s1791
          %1797 = dma.vmem_to_hbm [thread:$0]  %s1792, 192, %s1790, %s1765, 64, 64, 4
        $region72: #{tpu_custom_call.1} parent=63 // pred_fallthru
          _
      $region64: #{tpu_custom_call.1} parent=5 // pred_fallthru
        _
      %p1798 = scmp.le.s32.totalorder 2, %s25
      // Predicated region
      $region73: #{tpu_custom_call.1} parent=5 // pred_check
        %p1799 = pneg %p1798
      $region74: #{tpu_custom_call.1} parent=5 // pred_check_branch
        %1801 = sbr.rel (%p1799) target = $region76
      $region75: #{tpu_custom_call.1} parent=5 // pred_region
        %s1802 = ssub.s32 %s25, 2
        // Predicated region
        $region77: #{tpu_custom_call.1} parent=75 // pred_check
          %p1803 = pneg %p325
        $region78: #{tpu_custom_call.1} parent=75 // pred_check_branch
          %1805 = sbr.rel (%p1803) target = $region80
        $region79: #{tpu_custom_call.1} parent=75 // pred_region
          %s1806 = sand.u32 %s310, 1
          %s1807 = scalar_lea.sflag [#allocation3], %s1806
          %s1808 = sand.u32 %s310, 1
          %s1809 = smul.addr %s1808, 2
          %s1810 = scalar_lea.vmem [#allocation2], %s1809
          %1811 = dma.done %s1807, 32
        $region80: #{tpu_custom_call.1} parent=75 // pred_fallthru
          _
        // Predicated region
        $region81: #{tpu_custom_call.1} parent=75 // pred_check
          %p1812 = pneg %p351
        $region82: #{tpu_custom_call.1} parent=75 // pred_check_branch
          %1814 = sbr.rel (%p1812) target = $region84
        $region83: #{tpu_custom_call.1} parent=75 // pred_region
          %s1815 = sand.u32 %s336, 1
          %s1816 = scalar_lea.sflag [#allocation5], %s1815
          %s1817 = sand.u32 %s336, 1
          %s1818 = smul.addr %s1817, 12
          %s1819 = scalar_lea.vmem [#allocation4], %s1818
          %1820 = dma.done %s1816, 192
        $region84: #{tpu_custom_call.1} parent=75 // pred_fallthru
          _
      $region76: #{tpu_custom_call.1} parent=5 // pred_fallthru
        _
    $region6: #{tpu_custom_call.1} parent=1 // loop_footer
      %s29 = sadd.s32 1, %s25
    $region7: #{tpu_custom_call.1} parent=1 // loop_footer_branch
      %24 = sbr.rel target = $region3
    $region8: #{tpu_custom_call.1} parent=1 // loop_exit
      _
    %1821 = vsyncpa [#allocation3], 1
    %s1822 = scalar_lea.sflag [#allocation3], 1
    %1823 = vsyncpa %s1822, 1
    %1824 = vsyncpa [#allocation5], 1
    %s1825 = scalar_lea.sflag [#allocation5], 1
    %1826 = vsyncpa %s1825, 1

</llo_original>
